<compile_context>
chip_gen: v7x
topology: tpu7x:2x2x1
jax: 0.10.0
libtpu: 0.0.40
codegen_flags: <defaults>
</compile_context>

<pallas_src>
import functools

import numpy as np
import jax
import jax.numpy as jnp
from jax import lax
from jax.experimental import pallas as pl
from jax.experimental.pallas import tpu as pltpu


def _round_up(x, m):
    return ((x + m - 1) // m) * m


def _padded_tile_bytes(block_shape, dtype):
    """VMEM bytes of one buffered tile including sublane/lane layout padding."""
    itemsize = jnp.dtype(dtype).itemsize
    sublane = 8 * (4 // itemsize)          # 8 rows f32, 16 rows bf16
    dims = [int(d) for d in block_shape]
    if len(dims) >= 1:
        dims[-1] = _round_up(dims[-1], 128)
    if len(dims) >= 2:
        dims[-2] = _round_up(dims[-2], sublane)
    n = 1
    for d in dims:
        n *= d
    return n * itemsize


# ---------------------------------------------------------------------------
# Pallas kernel: per batch-tile, KH banded GEMMs (K = Wp*C) + fused bias epilogue.
# ---------------------------------------------------------------------------
def _basis_conv2d_kernel(x_ref, w_ref, b_ref, o_ref, *, kh, sh):
    # x_ref: (TB, Hp, Wp*C)            bf16  lane-dense, spatially pre-padded input slab
    # w_ref: (KH, Wp*C, Wout*Cout)     bf16  banded fused weight (conv_f*BN*conv_w fold)
    # b_ref: (1, Wout*Cout)            f32   fused bias tiled over Wout
    # o_ref: (TB, Hout, Wout*Cout)     f32   output channels folded into the W lane dim
    tb, hout, nlane = o_ref.shape
    kdim = w_ref.shape[1]
    m = tb * hout

    acc = jnp.zeros((m, nlane), jnp.float32)
    for i in range(kh):                                   # static, small -> unrolled
        rows = pl.ds(i, hout) if sh == 1 else pl.ds(i, hout, stride=sh)
        xi = x_ref[:, rows, :].reshape(m, kdim)           # leading-dim merge only
        acc = acc + jnp.dot(xi, w_ref[i], preferred_element_type=jnp.float32)
    acc = acc + b_ref[...]                                # f32 epilogue
    o_ref[...] = acc.reshape(tb, hout, nlane).astype(o_ref.dtype)


# ---------------------------------------------------------------------------
# Wrapper: BasisConv2d forward (conv_f -> BN(eval) -> conv_w), fully fused.
# ---------------------------------------------------------------------------
@functools.partial(jax.jit, static_argnames=("kernel_size", "stride", "padding",
                                              "compute_dtype", "single_buffer_weights"))
def basis_conv2d_forward(x, F, Wm, bias, bn_scale, bn_shift,
                         kernel_size, stride, padding,
                         compute_dtype=jnp.bfloat16,
                         single_buffer_weights=True):
    # x: (N, C, H, W) f32   F: (basis, C*KH*KW)   Wm: (out, basis)   bias: (out,)
    N, C, H, W = x.shape
    kh, kw = kernel_size
    sh, sw = stride
    ph, pw = padding
    basis, K = F.shape
    out_ch = Wm.shape[0]
    assert K == C * kh * kw

    hout = (H + 2 * ph - kh) // sh + 1
    wout = (W + 2 * pw - kw) // sw + 1
    hp, wp = H + 2 * ph, W + 2 * pw
    kdim = wp * C                       # GEMM contraction dim (merged W-taps x channels)
    nlane = wout * out_ch               # output lane dim (channels folded into W)

    f32 = jnp.float32
    single_buffer_weights = bool(single_buffer_weights) and hasattr(pl, "Buffered")

    # ---- host-side fold: conv_f -> BN(eval) -> conv_w  ==>  single conv (G, b_eff) ----
    G = (Wm.astype(f32) * bn_scale.astype(f32)[None, :]) @ F.astype(f32)      # (out, K)
    b_eff = Wm.astype(f32) @ bn_shift.astype(f32) + bias.astype(f32)          # (out,)
    Gt = G.reshape(out_ch, C, kh, kw).transpose(2, 3, 1, 0)                   # (kh,kw,C,out)

    # ---- banded (block-Toeplitz over W) weight:  (kh, Wp*C, Wout*Cout) ----
    # band[i, (w*sw + j)*C + c, w*out + o] = Gt[i, j, c, o]
    w_ids = jnp.arange(wout)
    c_ids = jnp.arange(C)
    o_ids = jnp.arange(out_ch)
    col_idx = w_ids[:, None] * out_ch + o_ids[None, :]                        # (wout, out)
    bands = []
    for i in range(kh):
        Wi = jnp.zeros((kdim, nlane), f32)
        for j in range(kw):
            row_idx = (w_ids * sw + j)[:, None] * C + c_ids[None, :]          # (wout, C)
            blk = jnp.broadcast_to(Gt[i, j][None, :, :], (wout, C, out_ch))
            Wi = Wi.at[row_idx[:, :, None], col_idx[:, None, :]].add(blk)
        bands.append(Wi)
    w_band = jnp.stack(bands, axis=0).astype(compute_dtype)                   # (kh,kdim,nlane)
    bias_t = jnp.tile(b_eff, wout).reshape(1, nlane)                          # f32

    # ---- input: NCHW -> NHWC once, spatial zero-pad, flatten (Wp, C) -> Wp*C ----
    xf = jnp.transpose(x, (0, 2, 3, 1))
    xf = jnp.pad(xf, ((0, 0), (ph, ph), (pw, pw), (0, 0)))
    xf = xf.reshape(N, hp, kdim).astype(compute_dtype)

    # ---- batch-tile selection: >=2 grid steps (>=4 if possible), VMEM from padded sizes ----
    def vmem_need(tb):
        in_b = _padded_tile_bytes((tb, hp, kdim), compute_dtype)
        out_b = _padded_tile_bytes((tb, hout, nlane), jnp.float32)
        w_b = _padded_tile_bytes((kh, kdim, nlane), compute_dtype)
        bias_b = _padded_tile_bytes((1, nlane), jnp.float32)
        w_bufs = 1 if single_buffer_weights else 2
        return 3 * in_b + 2 * out_b + w_bufs * (w_b + bias_b)

    rows_cap = 512                                     # keep per-step GEMM M modest
    tb = max(1, min(N, max(1, rows_cap // max(hout, 1))))
    min_steps = min(N, 4)
    while tb > 1 and -(-N // tb) < min_steps:
        tb -= 1
    vmem_budget = 40 * 1024 * 1024                     # fits v7x's 64 MiB with headroom
    while tb > 1 and vmem_need(tb) > vmem_budget:
        tb -= 1
    n_steps = -(-N // tb)
    n_pad = n_steps * tb
    if n_pad != N:                                     # pad batch instead of requiring divisors
        xf = jnp.pad(xf, ((0, n_pad - N), (0, 0), (0, 0)))

    vmem_limit = int(min(max(2 * vmem_need(tb), 16 * 1024 * 1024), 48 * 1024 * 1024))

    # ---- BlockSpecs (weights single-buffered; input deeper-buffered on long grids) ----
    x_kwargs, w_kwargs = {}, {}
    if single_buffer_weights:
        w_kwargs = dict(pipeline_mode=pl.Buffered(1))
        if n_steps >= 4:
            x_kwargs = dict(pipeline_mode=pl.Buffered(3))
    x_spec = pl.BlockSpec((tb, hp, kdim), lambda i: (i, 0, 0), **x_kwargs)
    w_spec = pl.BlockSpec((kh, kdim, nlane), lambda i: (0, 0, 0), **w_kwargs)
    b_spec = pl.BlockSpec((1, nlane), lambda i: (0, 0), **w_kwargs)
    o_spec = pl.BlockSpec((tb, hout, nlane), lambda i: (i, 0, 0))

    itemsize_c = jnp.dtype(compute_dtype).itemsize
    cost = pl.CostEstimate(
        flops=2 * n_pad * hout * kh * kdim * nlane,
        transcendentals=0,
        bytes_accessed=int(xf.size) * itemsize_c + int(w_band.size) * itemsize_c
        + int(bias_t.size) * 4 + n_pad * hout * nlane * 4,
    )

    kernel = functools.partial(_basis_conv2d_kernel, kh=kh, sh=sh)

    out = pl.pallas_call(
        kernel,
        out_shape=jax.ShapeDtypeStruct((n_pad, hout, nlane), jnp.float32),
        grid_spec=pltpu.PrefetchScalarGridSpec(
            num_scalar_prefetch=0,
            grid=(n_steps,),
            in_specs=[x_spec, w_spec, b_spec],
            out_specs=o_spec,
        ),
        compiler_params=pltpu.CompilerParams(
            dimension_semantics=("parallel",),
            vmem_limit_bytes=vmem_limit,
        ),
        cost_estimate=cost,
    )(xf, w_band, bias_t)

    # Unfold (Wout*Cout) lanes and convert to NCHW once, on the small output.
    out = out[:N].reshape(N, hout, wout, out_ch)
    return jnp.transpose(out, (0, 3, 1, 2))


# ---------------------------------------------------------------------------
# Deterministic parameter construction (mirrors BasisConv2d.__init__ / svd_init)
# ---------------------------------------------------------------------------
def svd_init(weight_np, basis_channels):
    out_ch = weight_np.shape[0]
    Hm = weight_np.reshape(out_ch, -1)                  # (out, K)
    _, _, vh = np.linalg.svd(Hm, full_matrices=False)   # singular values descending
    F = vh[:basis_channels, :]                          # (basis, K)
    w = Hm @ F.T                                        # (out, basis)
    return F.astype(weight_np.dtype), w.astype(weight_np.dtype)


if __name__ == "__main__":
    # Small shapes consistent with the module.
    N, C_in, H, W = 2, 4, 16, 16
    out_channels = 8
    kernel_size = (3, 3)
    stride = (1, 1)
    padding = (1, 1)
    basis_channels = 8                                  # <= C_in*KH*KW = 36
    add_bn = True
    eps = 1e-5

    key = jax.random.PRNGKey(0)
    kx, kw_, kb = jax.random.split(key, 3)
    x = jax.random.normal(kx, (N, C_in, H, W), dtype=jnp.float32)
    weight = jax.random.normal(kw_, (out_channels, C_in, *kernel_size), dtype=jnp.float32)
    bias = jax.random.normal(kb, (out_channels,), dtype=jnp.float32)

    # SVD-based basis decomposition (host-side, deterministic).
    F_np, w_np = svd_init(np.asarray(weight), basis_channels)
    F = jnp.asarray(F_np)                               # conv_f weight, flattened (basis, K)
    Wm = jnp.asarray(w_np)                              # conv_w weight, (out, basis)

    # BatchNorm2d(basis_channels), eval mode with default running stats.
    if add_bn:
        gamma = jnp.ones((basis_channels,), jnp.float32)
        beta = jnp.zeros((basis_channels,), jnp.float32)
        run_mean = jnp.zeros((basis_channels,), jnp.float32)
        run_var = jnp.ones((basis_channels,), jnp.float32)
        bn_scale = gamma / jnp.sqrt(run_var + eps)
        bn_shift = beta - run_mean * bn_scale
    else:
        bn_scale = jnp.ones((basis_channels,), jnp.float32)
        bn_shift = jnp.zeros((basis_channels,), jnp.float32)

    fwd = functools.partial(basis_conv2d_forward,
                            kernel_size=kernel_size, stride=stride, padding=padding)
    try:
        out = jax.block_until_ready(fwd(x, F, Wm, bias, bn_scale, bn_shift,
                                        single_buffer_weights=True))
    except Exception:
        # Pallas build without BlockSpec(pipeline_mode=...): identical numerics,
        # default double-buffered operands.
        out = jax.block_until_ready(fwd(x, F, Wm, bias, bn_scale, bn_shift,
                                        single_buffer_weights=False))

    # ------------------------- correctness checks --------------------------------
    pad2 = [(padding[0], padding[0]), (padding[1], padding[1])]
    dn = ("NCHW", "OIHW", "NCHW")
    hi = lax.Precision.HIGHEST

    # (a) Module-faithful two-stage f32 reference: conv_f -> BN(eval) -> conv_w.
    F4 = F.reshape(basis_channels, C_in, *kernel_size)
    y_ref = lax.conv_general_dilated(x, F4, stride, pad2, dimension_numbers=dn, precision=hi)
    y_ref = y_ref * bn_scale[None, :, None, None] + bn_shift[None, :, None, None]
    z_module = lax.conv_general_dilated(y_ref, Wm[:, :, None, None], (1, 1), [(0, 0), (0, 0)],
                                        dimension_numbers=dn, precision=hi)
    z_module = z_module + bias[None, :, None, None]

    # (b) Fused-weight f32 reference: validates the host-side BN + conv_w fold exactly.
    G_f32 = (Wm * bn_scale[None, :]) @ F                            # (out, K)
    b_eff = Wm @ bn_shift + bias
    G4 = G_f32.reshape(out_channels, C_in, *kernel_size)
    z_fused = lax.conv_general_dilated(x, G4, stride, pad2, dimension_numbers=dn,
                                       precision=hi) + b_eff[None, :, None, None]
    np.testing.assert_allclose(np.asarray(z_fused), np.asarray(z_module), rtol=1e-3, atol=1e-3)

    # (c) Kernel vs. a reference using the same bf16-rounded operands with f32 accumulation
    #     (the only deviation from the f32 module is bf16 input/weight rounding).
    z_bf16 = lax.conv_general_dilated(
        x.astype(jnp.bfloat16), G4.astype(jnp.bfloat16), stride, pad2,
        dimension_numbers=dn, preferred_element_type=jnp.float32,
    ) + b_eff[None, :, None, None]
    np.testing.assert_allclose(np.asarray(out), np.asarray(z_bf16), rtol=2e-3, atol=2e-3)

    print("KERNEL_OK")
</pallas_src>

<mosaic_0001>
module attributes {stable_mosaic.version = 11 : i64} {
  func.func private @main(%arg0: i32) attributes {dimension_semantics = [#tpu.dimension_semantics<core_parallel>], iteration_bounds = array<i64: 2>, tpu.core_type = #tpu.core_type<sc_scalar_subcore>, window_params = []} {
    return
  }
}

module attributes {stable_mosaic.version = 11 : i64} {
  func.func private @main(%arg0: i32) attributes {dimension_semantics = [#tpu.dimension_semantics<core_parallel>], iteration_bounds = array<i64: 2>, tpu.core_type = #tpu.core_type<sc_scalar_subcore>, window_params = []} {
    return
  }
}

module attributes {stable_mosaic.version = 11 : i64} {
  func.func @_basis_conv2d_kernel(%arg0: i32, %arg1: memref<1x18x72xbf16, #tpu.memory_space<vmem>>, %arg2: memref<3x72x128xbf16, #tpu.memory_space<vmem>>, %arg3: memref<1x128xf32, #tpu.memory_space<vmem>>, %arg4: memref<1x16x128xf32, #tpu.memory_space<vmem>>) attributes {dimension_semantics = [#tpu.dimension_semantics<parallel>], iteration_bounds = array<i64: 2>, scalar_prefetch = 0 : i64, scratch_operands = 0 : i64, tpu.core_type = #tpu.core_type<tc>, window_params = [{transform_indices = @transform_0, window_bounds = array<i64: 1, 18, 72>}, {pipeline_mode = #tpu.pipeline_mode<synchronous>, transform_indices = @transform_1, window_bounds = array<i64: 3, 72, 128>}, {pipeline_mode = #tpu.pipeline_mode<synchronous>, transform_indices = @transform_2, window_bounds = array<i64: 1, 128>}, {transform_indices = @transform_3, window_bounds = array<i64: 1, 16, 128>}]} {
    %cst = arith.constant 0.000000e+00 : f32
    %0 = vector.broadcast %cst : f32 to vector<16x128xf32>
    %c0 = arith.constant 0 : index
    %c0_0 = arith.constant 0 : index
    %c0_1 = arith.constant 0 : index
    %1 = vector.load %arg1[%c0, %c0_0, %c0_1] : memref<1x18x72xbf16, #tpu.memory_space<vmem>>, vector<1x16x72xbf16>
    %2 = vector.shape_cast %1 : vector<1x16x72xbf16> to vector<16x72xbf16>
    %c0_2 = arith.constant 0 : index
    %c0_3 = arith.constant 0 : index
    %c0_4 = arith.constant 0 : index
    %3 = vector.load %arg2[%c0_2, %c0_3, %c0_4] : memref<3x72x128xbf16, #tpu.memory_space<vmem>>, vector<1x72x128xbf16>
    %4 = vector.shape_cast %3 : vector<1x72x128xbf16> to vector<72x128xbf16>
    %cst_5 = arith.constant dense<0.000000e+00> : vector<16x128xf32>
    %5 = tpu.matmul %2, %4, %cst_5 {dimension_numbers = #tpu.dot_dimension_numbers<[1], [0], [0], [1], [0, 0, 1, 1], [], []>} : vector<16x72xbf16>, vector<72x128xbf16>, vector<16x128xf32> -> vector<16x128xf32>
    %6 = arith.addf %0, %5 : vector<16x128xf32>
    %c0_6 = arith.constant 0 : index
    %c1 = arith.constant 1 : index
    %c0_7 = arith.constant 0 : index
    %7 = vector.load %arg1[%c0_6, %c1, %c0_7] : memref<1x18x72xbf16, #tpu.memory_space<vmem>>, vector<1x16x72xbf16>
    %8 = vector.shape_cast %7 : vector<1x16x72xbf16> to vector<16x72xbf16>
    %c1_8 = arith.constant 1 : index
    %c0_9 = arith.constant 0 : index
    %c0_10 = arith.constant 0 : index
    %9 = vector.load %arg2[%c1_8, %c0_9, %c0_10] : memref<3x72x128xbf16, #tpu.memory_space<vmem>>, vector<1x72x128xbf16>
    %10 = vector.shape_cast %9 : vector<1x72x128xbf16> to vector<72x128xbf16>
    %cst_11 = arith.constant dense<0.000000e+00> : vector<16x128xf32>
    %11 = tpu.matmul %8, %10, %cst_11 {dimension_numbers = #tpu.dot_dimension_numbers<[1], [0], [0], [1], [0, 0, 1, 1], [], []>} : vector<16x72xbf16>, vector<72x128xbf16>, vector<16x128xf32> -> vector<16x128xf32>
    %12 = arith.addf %6, %11 : vector<16x128xf32>
    %c0_12 = arith.constant 0 : index
    %c2 = arith.constant 2 : index
    %c0_13 = arith.constant 0 : index
    %13 = vector.load %arg1[%c0_12, %c2, %c0_13] : memref<1x18x72xbf16, #tpu.memory_space<vmem>>, vector<1x16x72xbf16>
    %14 = vector.shape_cast %13 : vector<1x16x72xbf16> to vector<16x72xbf16>
    %c2_14 = arith.constant 2 : index
    %c0_15 = arith.constant 0 : index
    %c0_16 = arith.constant 0 : index
    %15 = vector.load %arg2[%c2_14, %c0_15, %c0_16] : memref<3x72x128xbf16, #tpu.memory_space<vmem>>, vector<1x72x128xbf16>
    %16 = vector.shape_cast %15 : vector<1x72x128xbf16> to vector<72x128xbf16>
    %cst_17 = arith.constant dense<0.000000e+00> : vector<16x128xf32>
    %17 = tpu.matmul %14, %16, %cst_17 {dimension_numbers = #tpu.dot_dimension_numbers<[1], [0], [0], [1], [0, 0, 1, 1], [], []>} : vector<16x72xbf16>, vector<72x128xbf16>, vector<16x128xf32> -> vector<16x128xf32>
    %18 = arith.addf %12, %17 : vector<16x128xf32>
    %c0_18 = arith.constant 0 : index
    %c0_19 = arith.constant 0 : index
    %19 = vector.load %arg3[%c0_18, %c0_19] : memref<1x128xf32, #tpu.memory_space<vmem>>, vector<1x128xf32>
    %20 = vector.broadcast %19 : vector<1x128xf32> to vector<16x128xf32>
    %21 = arith.addf %18, %20 : vector<16x128xf32>
    %22 = vector.shape_cast %21 : vector<16x128xf32> to vector<1x16x128xf32>
    %c0_20 = arith.constant 0 : index
    %c0_21 = arith.constant 0 : index
    %c0_22 = arith.constant 0 : index
    %23 = vector.load %arg4[%c0_20, %c0_21, %c0_22] : memref<1x16x128xf32, #tpu.memory_space<vmem>>, vector<1x16x128xf32>
    tpu.vector_store %arg4[%c0_20, %c0_21, %c0_22], %22 {strides = array<i32>} : memref<1x16x128xf32, #tpu.memory_space<vmem>>, vector<1x16x128xf32>,
    return
  }
  func.func @transform_0(%arg0: i32) -> (i32, i32, i32) {
    %c0_i32 = arith.constant 0 : i32
    %c0_i32_0 = arith.constant 0 : i32
    %c0_i32_1 = arith.constant 0 : i32
    return %arg0, %c0_i32, %c0_i32_0 : i32, i32, i32
  }
  func.func @transform_1(%arg0: i32) -> (i32, i32, i32) {
    %c0_i32 = arith.constant 0 : i32
    %c0_i32_0 = arith.constant 0 : i32
    %c0_i32_1 = arith.constant 0 : i32
    %c0_i32_2 = arith.constant 0 : i32
    return %c0_i32, %c0_i32_0, %c0_i32_1 : i32, i32, i32
  }
  func.func @transform_2(%arg0: i32) -> (i32, i32) {
    %c0_i32 = arith.constant 0 : i32
    %c0_i32_0 = arith.constant 0 : i32
    %c0_i32_1 = arith.constant 0 : i32
    return %c0_i32, %c0_i32_0 : i32, i32
  }
  func.func @transform_3(%arg0: i32) -> (i32, i32, i32) {
    %c0_i32 = arith.constant 0 : i32
    %c0_i32_0 = arith.constant 0 : i32
    %c0_i32_1 = arith.constant 0 : i32
    return %arg0, %c0_i32, %c0_i32_0 : i32, i32, i32
  }
}

module attributes {stable_mosaic.version = 11 : i64} {
  func.func private @main(%arg0: i32) attributes {dimension_semantics = [#tpu.dimension_semantics<core_parallel>], iteration_bounds = array<i64: 2>, tpu.core_type = #tpu.core_type<sc_scalar_subcore>, window_params = []} {
    return
  }
}

module attributes {stable_mosaic.version = 11 : i64} {
  func.func private @main(%arg0: i32) attributes {dimension_semantics = [#tpu.dimension_semantics<core_parallel>], iteration_bounds = array<i64: 2>, tpu.core_type = #tpu.core_type<sc_scalar_subcore>, window_params = []} {
    return
  }
}

module attributes {stable_mosaic.version = 11 : i64} {
  func.func @_basis_conv2d_kernel(%arg0: i32, %arg1: memref<1x18x72xbf16, #tpu.memory_space<vmem>>, %arg2: memref<3x72x128xbf16, #tpu.memory_space<vmem>>, %arg3: memref<1x128xf32, #tpu.memory_space<vmem>>, %arg4: memref<1x16x128xf32, #tpu.memory_space<vmem>>) attributes {dimension_semantics = [#tpu.dimension_semantics<parallel>], iteration_bounds = array<i64: 2>, scalar_prefetch = 0 : i64, scratch_operands = 0 : i64, tpu.core_type = #tpu.core_type<tc>, window_params = [{transform_indices = @transform_0, window_bounds = array<i64: 1, 18, 72>}, {pipeline_mode = #tpu.pipeline_mode<synchronous>, transform_indices = @transform_1, window_bounds = array<i64: 3, 72, 128>}, {pipeline_mode = #tpu.pipeline_mode<synchronous>, transform_indices = @transform_2, window_bounds = array<i64: 1, 128>}, {transform_indices = @transform_3, window_bounds = array<i64: 1, 16, 128>}]} {
    %cst = arith.constant 0.000000e+00 : f32
    %0 = vector.broadcast %cst : f32 to vector<16x128xf32>
    %c0 = arith.constant 0 : index
    %c0_0 = arith.constant 0 : index
    %c0_1 = arith.constant 0 : index
    %1 = vector.load %arg1[%c0, %c0_0, %c0_1] : memref<1x18x72xbf16, #tpu.memory_space<vmem>>, vector<1x16x72xbf16>
    %2 = vector.shape_cast %1 : vector<1x16x72xbf16> to vector<16x72xbf16>
    %c0_2 = arith.constant 0 : index
    %c0_3 = arith.constant 0 : index
    %c0_4 = arith.constant 0 : index
    %3 = vector.load %arg2[%c0_2, %c0_3, %c0_4] : memref<3x72x128xbf16, #tpu.memory_space<vmem>>, vector<1x72x128xbf16>
    %4 = vector.shape_cast %3 : vector<1x72x128xbf16> to vector<72x128xbf16>
    %cst_5 = arith.constant dense<0.000000e+00> : vector<16x128xf32>
    %5 = tpu.matmul %2, %4, %cst_5 {dimension_numbers = #tpu.dot_dimension_numbers<[1], [0], [0], [1], [0, 0, 1, 1], [], []>} : vector<16x72xbf16>, vector<72x128xbf16>, vector<16x128xf32> -> vector<16x128xf32>
    %6 = arith.addf %0, %5 : vector<16x128xf32>
    %c0_6 = arith.constant 0 : index
    %c1 = arith.constant 1 : index
    %c0_7 = arith.constant 0 : index
    %7 = vector.load %arg1[%c0_6, %c1, %c0_7] : memref<1x18x72xbf16, #tpu.memory_space<vmem>>, vector<1x16x72xbf16>
    %8 = vector.shape_cast %7 : vector<1x16x72xbf16> to vector<16x72xbf16>
    %c1_8 = arith.constant 1 : index
    %c0_9 = arith.constant 0 : index
    %c0_10 = arith.constant 0 : index
    %9 = vector.load %arg2[%c1_8, %c0_9, %c0_10] : memref<3x72x128xbf16, #tpu.memory_space<vmem>>, vector<1x72x128xbf16>
    %10 = vector.shape_cast %9 : vector<1x72x128xbf16> to vector<72x128xbf16>
    %cst_11 = arith.constant dense<0.000000e+00> : vector<16x128xf32>
    %11 = tpu.matmul %8, %10, %cst_11 {dimension_numbers = #tpu.dot_dimension_numbers<[1], [0], [0], [1], [0, 0, 1, 1], [], []>} : vector<16x72xbf16>, vector<72x128xbf16>, vector<16x128xf32> -> vector<16x128xf32>
    %12 = arith.addf %6, %11 : vector<16x128xf32>
    %c0_12 = arith.constant 0 : index
    %c2 = arith.constant 2 : index
    %c0_13 = arith.constant 0 : index
    %13 = vector.load %arg1[%c0_12, %c2, %c0_13] : memref<1x18x72xbf16, #tpu.memory_space<vmem>>, vector<1x16x72xbf16>
    %14 = vector.shape_cast %13 : vector<1x16x72xbf16> to vector<16x72xbf16>
    %c2_14 = arith.constant 2 : index
    %c0_15 = arith.constant 0 : index
    %c0_16 = arith.constant 0 : index
    %15 = vector.load %arg2[%c2_14, %c0_15, %c0_16] : memref<3x72x128xbf16, #tpu.memory_space<vmem>>, vector<1x72x128xbf16>
    %16 = vector.shape_cast %15 : vector<1x72x128xbf16> to vector<72x128xbf16>
    %cst_17 = arith.constant dense<0.000000e+00> : vector<16x128xf32>
    %17 = tpu.matmul %14, %16, %cst_17 {dimension_numbers = #tpu.dot_dimension_numbers<[1], [0], [0], [1], [0, 0, 1, 1], [], []>} : vector<16x72xbf16>, vector<72x128xbf16>, vector<16x128xf32> -> vector<16x128xf32>
    %18 = arith.addf %12, %17 : vector<16x128xf32>
    %c0_18 = arith.constant 0 : index
    %c0_19 = arith.constant 0 : index
    %19 = vector.load %arg3[%c0_18, %c0_19] : memref<1x128xf32, #tpu.memory_space<vmem>>, vector<1x128xf32>
    %20 = vector.broadcast %19 : vector<1x128xf32> to vector<16x128xf32>
    %21 = arith.addf %18, %20 : vector<16x128xf32>
    %22 = vector.shape_cast %21 : vector<16x128xf32> to vector<1x16x128xf32>
    %c0_20 = arith.constant 0 : index
    %c0_21 = arith.constant 0 : index
    %c0_22 = arith.constant 0 : index
    %23 = vector.load %arg4[%c0_20, %c0_21, %c0_22] : memref<1x16x128xf32, #tpu.memory_space<vmem>>, vector<1x16x128xf32>
    tpu.vector_store %arg4[%c0_20, %c0_21, %c0_22], %22 {strides = array<i32>} : memref<1x16x128xf32, #tpu.memory_space<vmem>>, vector<1x16x128xf32>,
    return
  }
  func.func @transform_0(%arg0: i32) -> (i32, i32, i32) {
    %c0_i32 = arith.constant 0 : i32
    %c0_i32_0 = arith.constant 0 : i32
    %c0_i32_1 = arith.constant 0 : i32
    return %arg0, %c0_i32, %c0_i32_0 : i32, i32, i32
  }
  func.func @transform_1(%arg0: i32) -> (i32, i32, i32) {
    %c0_i32 = arith.constant 0 : i32
    %c0_i32_0 = arith.constant 0 : i32
    %c0_i32_1 = arith.constant 0 : i32
    %c0_i32_2 = arith.constant 0 : i32
    return %c0_i32, %c0_i32_0, %c0_i32_1 : i32, i32, i32
  }
  func.func @transform_2(%arg0: i32) -> (i32, i32) {
    %c0_i32 = arith.constant 0 : i32
    %c0_i32_0 = arith.constant 0 : i32
    %c0_i32_1 = arith.constant 0 : i32
    return %c0_i32, %c0_i32_0 : i32, i32
  }
  func.func @transform_3(%arg0: i32) -> (i32, i32, i32) {
    %c0_i32 = arith.constant 0 : i32
    %c0_i32_0 = arith.constant 0 : i32
    %c0_i32_1 = arith.constant 0 : i32
    return %arg0, %c0_i32, %c0_i32_0 : i32, i32, i32
  }
}

</mosaic_0001>

<llo_original>
// kernel: tile.8
$region0: #{tile.8}
  #allocation0 [shape = 's32[1]{0}', space=sflag, size = 0x4, scoped, tag = 'scoped memory for tile.8']
  %s0 = inlined_call_operand.vmem [shape: f32[8], index: 0, kind: input, shape index: {}]
  %s1 = inlined_call_operand.vmem [shape: f32[16,8], index: 1, kind: output, shape index: {}]
  // Predicated region
  $region2: #{tile.8} parent=0 // pred_check
    _
  $region3: #{tile.8} parent=0 // pred_check_branch
    %3 = sbr.rel (0) target = $region5
  $region4: #{tile.8} parent=0 // pred_region
    _
  $region5: #{tile.8} parent=0 // pred_fallthru
    _
  %v4 = vld [vmem:[%s0] ss:$0 sm:$0xff]
  %5 = vst [vmem:[%s1] sm:$0xff] %v4
  %s6 = scalar_lea.vmem %s1, 8
  %7 = vst [vmem:[%s6] sm:$0xff] %v4

// kernel: tile.9
$region0: #{tile.9}
  %s0 = inlined_call_operand.vmem [shape: f32[16,8], index: 0, kind: input, shape index: {}]
  %s1 = inlined_call_operand.hbm [shape: f32[1,128], index: 1, kind: output, shape index: {}]
  $region1: #{tile.9} parent=0
    #allocation0 [shape = 'u8[512]{0}', space=vmem, size = 0x400, scoped, tag = 'operand span for operand 1']
    #allocation1 [shape = 's32[1]{0}', space=sflag, size = 0x4, scoped, tag = 'scoped memory for tile.9']
    #allocation2 [shape = 'u8[4096]{0}', space=vmem, size = 0x1000, scoped, tag = 'scoped mem for output reshape']
    %2 = vsyncpa [#allocation1], 0
    %v3 = vld [vmem:[%s0] sm:$0x1]
    %vm4 = vcmask 64512
    %5 = vst.msk [vmem:[#allocation2] sm:$0x1] %vm4, %v3
    %s6 = scalar_lea.vmem %s0, 15
    %v7 = vld [vmem:[%s6] sm:$0x1]
    %8 = vrot.lane.b32.xlu0 %v7, 120
    %v9 = vpop.permute.xlu0 %8
    %vm10 = vcmask 1048512
    %11 = vst.msk [vmem:[#allocation2] sm:$0x1] %vm10, %v9
    %s12 = scalar_lea.vmem %s0, 14
    %v13 = vld [vmem:[%s12] sm:$0x1]
    %14 = vrot.lane.b32.xlu0 %v13, 112
    %v15 = vpop.permute.xlu0 %14
    %vm16 = vcmask 982912
    %17 = vst.msk [vmem:[#allocation2] sm:$0x1] %vm16, %v15
    %s18 = scalar_lea.vmem %s0, 13
    %v19 = vld [vmem:[%s18] sm:$0x1]
    %20 = vrot.lane.b32.xlu0 %v19, 104
    %v21 = vpop.permute.xlu0 %20
    %vm22 = vcmask 917312
    %23 = vst.msk [vmem:[#allocation2] sm:$0x1] %vm22, %v21
    %s24 = scalar_lea.vmem %s0, 12
    %v25 = vld [vmem:[%s24] sm:$0x1]
    %26 = vrot.lane.b32.xlu0 %v25, 96
    %v27 = vpop.permute.xlu0 %26
    %vm28 = vcmask 851712
    %29 = vst.msk [vmem:[#allocation2] sm:$0x1] %vm28, %v27
    %s30 = scalar_lea.vmem %s0, 11
    %v31 = vld [vmem:[%s30] sm:$0x1]
    %32 = vrot.lane.b32.xlu0 %v31, 88
    %v33 = vpop.permute.xlu0 %32
    %vm34 = vcmask 786112
    %35 = vst.msk [vmem:[#allocation2] sm:$0x1] %vm34, %v33
    %s36 = scalar_lea.vmem %s0, 10
    %v37 = vld [vmem:[%s36] sm:$0x1]
    %38 = vrot.lane.b32.xlu0 %v37, 80
    %v39 = vpop.permute.xlu0 %38
    %vm40 = vcmask 720512
    %41 = vst.msk [vmem:[#allocation2] sm:$0x1] %vm40, %v39
    %s42 = scalar_lea.vmem %s0, 9
    %v43 = vld [vmem:[%s42] sm:$0x1]
    %44 = vrot.lane.b32.xlu0 %v43, 72
    %v45 = vpop.permute.xlu0 %44
    %vm46 = vcmask 654912
    %47 = vst.msk [vmem:[#allocation2] sm:$0x1] %vm46, %v45
    %s48 = scalar_lea.vmem %s0, 8
    %v49 = vld [vmem:[%s48] sm:$0x1]
    %50 = vrot.lane.b32.xlu0 %v49, 64
    %v51 = vpop.permute.xlu0 %50
    %vm52 = vcmask 589312
    %53 = vst.msk [vmem:[#allocation2] sm:$0x1] %vm52, %v51
    %s54 = scalar_lea.vmem %s0, 7
    %v55 = vld [vmem:[%s54] sm:$0x1]
    %56 = vrot.lane.b32.xlu0 %v55, 56
    %v57 = vpop.permute.xlu0 %56
    %vm58 = vcmask 523712
    %59 = vst.msk [vmem:[#allocation2] sm:$0x1] %vm58, %v57
    %s60 = scalar_lea.vmem %s0, 6
    %v61 = vld [vmem:[%s60] sm:$0x1]
    %62 = vrot.lane.b32.xlu0 %v61, 48
    %v63 = vpop.permute.xlu0 %62
    %vm64 = vcmask 458112
    %65 = vst.msk [vmem:[#allocation2] sm:$0x1] %vm64, %v63
    %s66 = scalar_lea.vmem %s0, 5
    %v67 = vld [vmem:[%s66] sm:$0x1]
    %68 = vrot.lane.b32.xlu0 %v67, 40
    %v69 = vpop.permute.xlu0 %68
    %vm70 = vcmask 392512
    %71 = vst.msk [vmem:[#allocation2] sm:$0x1] %vm70, %v69
    %s72 = scalar_lea.vmem %s0, 4
    %v73 = vld [vmem:[%s72] sm:$0x1]
    %74 = vrot.lane.b32.xlu0 %v73, 32
    %v75 = vpop.permute.xlu0 %74
    %vm76 = vcmask 326912
    %77 = vst.msk [vmem:[#allocation2] sm:$0x1] %vm76, %v75
    %s78 = scalar_lea.vmem %s0, 3
    %v79 = vld [vmem:[%s78] sm:$0x1]
    %80 = vrot.lane.b32.xlu0 %v79, 24
    %v81 = vpop.permute.xlu0 %80
    %vm82 = vcmask 261312
    %83 = vst.msk [vmem:[#allocation2] sm:$0x1] %vm82, %v81
    %s84 = scalar_lea.vmem %s0, 2
    %v85 = vld [vmem:[%s84] sm:$0x1]
    %86 = vrot.lane.b32.xlu0 %v85, 16
    %v87 = vpop.permute.xlu0 %86
    %vm88 = vcmask 195712
    %89 = vst.msk [vmem:[#allocation2] sm:$0x1] %vm88, %v87
    %s90 = scalar_lea.vmem %s0, 1
    %v91 = vld [vmem:[%s90] sm:$0x1]
    %92 = vrot.lane.b32.xlu0 %v91, 8
    %v93 = vpop.permute.xlu0 %92
    %vm94 = vcmask 130112
    %95 = vst.msk [vmem:[#allocation2] sm:$0x1] %vm94, %v93
    %s97 = sshllo.u32 0, 1
    %v99 = vld [vmem:[#allocation2] sm:%s97]
    %s100 = sshllo.u32 0, 1
    %101 = vst [vmem:[#allocation0] sm:%s100] %v99
    %s103 = ssub.s32 16, 16
    %104 = vsyncadd [#allocation1], %s103
    %s106 = sshll.u32 [#allocation0], 4
    %s107 = int_to_ptr.vmem [resolvable:$true] %s106
    %109 = dma.vmem_to_hbm [thread:$0]  %s107, 16, %s1, [#allocation1]
    %110 = dma.done [#allocation1], 16
    %111 = vsyncpa [#allocation1], 1

// kernel: basis_conv2d_forward.1
$region0: #{basis_conv2d_forward.1}
  #allocation0 [shape = 'u32[]', space=smem, size = 0x4, offset = 0x4, fixed_abs, tag = 'smem constant byte address 0x4 - core index']
  #allocation1 [shape = 'u32[144,128]{1,0:T(1,128)}', space=vmem, size = 0x12000, scoped, tag = 'internal scratch']
  %s0 = inlined_call_operand.vmem [shape: bf16[2,18,72], index: 0, kind: input, shape index: {}]
  %s1 = inlined_call_operand.vmem [shape: bf16[3,72,128], index: 1, kind: input, shape index: {}]
  %s2 = inlined_call_operand.vmem [shape: f32[1,128], index: 2, kind: input, shape index: {}]
  %s3 = inlined_call_operand.vmem [shape: f32[2,16,128], index: 3, kind: output, shape index: {}]
  %s4 = sld [smem:[#allocation0]]
  $region45: #{basis_conv2d_forward.1} parent=0
    _
  %s6 = ssub.s32 1, %s4
  %s7 = scalar_select 0, %s6, %s4
  loop: start=0, step=1, limit=4
  $region2: #{basis_conv2d_forward.1} parent=0 // loop_pre_header
    _
  $region3: #{basis_conv2d_forward.1} parent=0 // loop_header
    %s9 = sphi 0, %s13
    %p10 = scmp.ge.s32.totalorder %s9, 4
    %s19 = sphi 0, %s21
    %s22 = sphi 0, %s19
    %s23 = sphi 0, %s22
    %s39 = sphi 0, %s23
    %s43 = sphi 0, %s43
    %s45 = sphi 0, %s43
    %s46 = sphi 0, %s45
    %s60 = sphi 0, %s46
    %s64 = sphi 0, %s64
    %s66 = sphi 0, %s64
    %s67 = sphi 0, %s66
    %s81 = sphi 0, %s67
    %s87 = sphi 0, %s89
    %s90 = sphi 0, %s87
    %s91 = sphi 0, %s90
    %s107 = sphi 0, %s91
  $region4: #{basis_conv2d_forward.1} parent=0 // loop_header_branch
    %12 = sbr.rel (%p10) target = $region8
  $region5: #{basis_conv2d_forward.1} parent=0 // loop_body
    %s14 = ssub.s32 %s9, 1
    %s15 = ssub.s32 %s9, 2
    %s16 = sadd.s32 %s9, 1
    %s17 = ssub.s32 %s9, %s16
    %p18 = scmp.eq.s32.totalorder %s17, 0
    %s20 = sadd.s32 %s19, 1
    %s21 = scalar_select %p18, %s19, %s20
    %p24 = pneg %p18
    %p25 = scmp.eq.s32.totalorder %s9, 1
    %p26 = por %p24, %p25
    %p27 = scmp.ne.s32.totalorder %s19, %s22
    %p28 = scmp.eq.s32.totalorder %s9, 0
    %p29 = por %p27, %p28
    %p30 = scmp.ne.s32.totalorder %s19, %s22
    %p31 = scmp.eq.s32.totalorder %s14, 1
    %p32 = por %p30, %p31
    %p33 = scmp.ne.s32.totalorder %s22, %s23
    %p34 = scmp.eq.s32.totalorder %s14, 0
    %p35 = por %p33, %p34
    %p36 = scmp.ne.s32.totalorder %s22, %s23
    %p37 = scmp.eq.s32.totalorder %s15, 1
    %p38 = por %p36, %p37
    %p40 = scmp.ne.s32.totalorder %s23, %s39
    %p41 = scmp.eq.s32.totalorder %s15, 0
    %p42 = por %p40, %p41
    %s44 = sadd.s32 %s43, 1
    %p47 = scmp.eq.s32.totalorder %s9, 1
    %p48 = scmp.ne.s32.totalorder %s43, %s45
    %p49 = scmp.eq.s32.totalorder %s9, 0
    %p50 = por %p48, %p49
    %p51 = scmp.ne.s32.totalorder %s43, %s45
    %p52 = scmp.eq.s32.totalorder %s14, 1
    %p53 = por %p51, %p52
    %p54 = scmp.ne.s32.totalorder %s45, %s46
    %p55 = scmp.eq.s32.totalorder %s14, 0
    %p56 = por %p54, %p55
    %p57 = scmp.ne.s32.totalorder %s45, %s46
    %p58 = scmp.eq.s32.totalorder %s15, 1
    %p59 = por %p57, %p58
    %p61 = scmp.ne.s32.totalorder %s46, %s60
    %p62 = scmp.eq.s32.totalorder %s15, 0
    %p63 = por %p61, %p62
    %s65 = sadd.s32 %s64, 1
    %p68 = scmp.eq.s32.totalorder %s9, 1
    %p69 = scmp.ne.s32.totalorder %s64, %s66
    %p70 = scmp.eq.s32.totalorder %s9, 0
    %p71 = por %p69, %p70
    %p72 = scmp.ne.s32.totalorder %s64, %s66
    %p73 = scmp.eq.s32.totalorder %s14, 1
    %p74 = por %p72, %p73
    %p75 = scmp.ne.s32.totalorder %s66, %s67
    %p76 = scmp.eq.s32.totalorder %s14, 0
    %p77 = por %p75, %p76
    %p78 = scmp.ne.s32.totalorder %s66, %s67
    %p79 = scmp.eq.s32.totalorder %s15, 1
    %p80 = por %p78, %p79
    %p82 = scmp.ne.s32.totalorder %s67, %s81
    %p83 = scmp.eq.s32.totalorder %s15, 0
    %p84 = por %p82, %p83
    %s85 = ssub.s32 %s9, %s16
    %p86 = scmp.eq.s32.totalorder %s85, 0
    %s88 = sadd.s32 %s87, 1
    %s89 = scalar_select %p86, %s87, %s88
    %p92 = pneg %p86
    %p93 = scmp.eq.s32.totalorder %s9, 1
    %p94 = por %p92, %p93
    %p95 = scmp.ne.s32.totalorder %s87, %s90
    %p96 = scmp.eq.s32.totalorder %s9, 0
    %p97 = por %p95, %p96
    %p98 = scmp.ne.s32.totalorder %s87, %s90
    %p99 = scmp.eq.s32.totalorder %s14, 1
    %p100 = por %p98, %p99
    %p101 = scmp.ne.s32.totalorder %s90, %s91
    %p102 = scmp.eq.s32.totalorder %s14, 0
    %p103 = por %p101, %p102
    %p104 = scmp.ne.s32.totalorder %s90, %s91
    %p105 = scmp.eq.s32.totalorder %s15, 1
    %p106 = por %p104, %p105
    %p108 = scmp.ne.s32.totalorder %s91, %s107
    %p109 = scmp.eq.s32.totalorder %s15, 0
    %p110 = por %p108, %p109
    %p111 = scmp.le.s32.totalorder 1, %s9
    %p112 = scmp.lt.s32.totalorder %s9, 3
    %p113 = pnand %p111, %p112
    %p114 = pneg %p113
    // Predicated region
    $region9: #{basis_conv2d_forward.1} parent=5 // pred_check
      _
    $region10: #{basis_conv2d_forward.1} parent=5 // pred_check_branch
      %116 = sbr.rel (%p113) target = $region12
    $region11: #{basis_conv2d_forward.1} parent=5 // pred_region
      %s117 = ssub.s32 %s9, 1
      // Predicated region
      $region13: #{basis_conv2d_forward.1} parent=11 // pred_check
        %p118 = pneg %p56
      $region14: #{basis_conv2d_forward.1} parent=11 // pred_check_branch
        %120 = sbr.rel (%p118) target = $region16
      $region15: #{basis_conv2d_forward.1} parent=11 // pred_region
        _
      $region16: #{basis_conv2d_forward.1} parent=11 // pred_fallthru
        _
      // Predicated region
      $region17: #{basis_conv2d_forward.1} parent=11 // pred_check
        %p121 = pneg %p77
      $region18: #{basis_conv2d_forward.1} parent=11 // pred_check_branch
        %123 = sbr.rel (%p121) target = $region20
      $region19: #{basis_conv2d_forward.1} parent=11 // pred_region
        _
      $region20: #{basis_conv2d_forward.1} parent=11 // pred_fallthru
        _
    $region12: #{basis_conv2d_forward.1} parent=5 // pred_fallthru
      _
    %p124 = scmp.lt.s32.totalorder %s9, 2
    // Predicated region
    $region21: #{basis_conv2d_forward.1} parent=5 // pred_check
      %p125 = pneg %p124
    $region22: #{basis_conv2d_forward.1} parent=5 // pred_check_branch
      %127 = sbr.rel (%p125) target = $region24
    $region23: #{basis_conv2d_forward.1} parent=5 // pred_region
      // Predicated region
      $region25: #{basis_conv2d_forward.1} parent=23 // pred_check
        %p128 = pneg %p29
      $region26: #{basis_conv2d_forward.1} parent=23 // pred_check_branch
        %130 = sbr.rel (%p128) target = $region28
      $region27: #{basis_conv2d_forward.1} parent=23 // pred_region
        %p131 = scmp.lt.s32.totalorder %s9, 1
        %s132 = scalar_select %p131, %s9, 1
        %s133 = smul.addr %s132, 3
        %s134 = smul.addr %s133, 4
        %s135 = scalar_lea.vmem %s0, %s134
      $region28: #{basis_conv2d_forward.1} parent=23 // pred_fallthru
        _
    $region24: #{basis_conv2d_forward.1} parent=5 // pred_fallthru
      _
    %p136 = scmp.le.s32.totalorder 1, %s9
    %p137 = scmp.lt.s32.totalorder %s9, 3
    %p138 = pnand %p136, %p137
    %p139 = pneg %p138
    // Predicated region
    $region29: #{basis_conv2d_forward.1} parent=5 // pred_check
      _
    $region30: #{basis_conv2d_forward.1} parent=5 // pred_check_branch
      %141 = sbr.rel (%p138) target = $region32
    $region31: #{basis_conv2d_forward.1} parent=5 // pred_region
      %s142 = ssub.s32 %s9, 1
      %p143 = scmp.lt.s32.totalorder %s14, 1
      %s144 = scalar_select %p143, %s14, 1
      %s145 = smul.addr %s144, 3
      %s146 = smul.addr %s145, 4
      %s147 = scalar_lea.vmem %s0, %s146
      %p148 = pneg %p35
      %p149 = pneg %p32
      %p150 = pneg %p56
      %p151 = pneg %p53
      %p152 = pneg %p77
      %p153 = pneg %p74
      %p154 = pneg %p103
      %p155 = pneg %p100
      %p156 = scmp.lt.s32.totalorder %s14, 1
      %s157 = scalar_select %p156, %s14, 1
      %s158 = smul.addr %s157, 2
      %s159 = smul.addr %s158, 8
      %s160 = scalar_lea.vmem %s3, %s159
      %p161 = scmp.lt.s32.totalorder %s14, 1
      %s162 = scalar_select %p161, %s14, 1
      %s163 = smul.addr %s162, 3
      %s164 = smul.addr %s163, 4
      %s165 = scalar_lea.vmem %s0, %s164
      %p166 = scmp.lt.s32.totalorder %s14, 1
      %s167 = scalar_select %p166, %s14, 1
      %s168 = smul.addr %s167, 2
      %s169 = smul.addr %s168, 8
      %s170 = scalar_lea.vmem %s3, %s169
      %v172 = vld [vmem:[%s165] sm:$0xf]
      %v173 = vld [vmem:[%s165 + $0x4] sm:$0xf]
      %v174 = vld [vmem:[%s1] sm:$0xf]
      %v175 = vld [vmem:[%s1 + $0x4] sm:$0xf]
      %v176 = vld [vmem:[%s1 + $0x8] sm:$0xf]
      %v177 = vld [vmem:[%s1 + $0xc] sm:$0xf]
      %v178 = vld [vmem:[%s1 + $0x10] sm:$0xf]
      %v179 = vld [vmem:[%s1 + $0x14] sm:$0xf]
      %v180 = vld [vmem:[%s1 + $0x18] sm:$0xf]
      %v181 = vld [vmem:[%s1 + $0x1c] sm:$0xf]
      %v182 = vld [vmem:[%s1 + $0x20] sm:$0xf]
      %v183 = vld [vmem:[%s165 + $0x8] sm:$0x1]
      %s184 = scalar_lea.vmem %s1, 36
      %v185 = vld [vmem:[%s184] sm:$0xf]
      %v186 = vld [vmem:[%s184 + $0x4] sm:$0xf]
      %v187 = vld [vmem:[%s184 + $0x8] sm:$0xf]
      %v188 = vld [vmem:[%s184 + $0xc] sm:$0xf]
      %v189 = vld [vmem:[%s184 + $0x10] sm:$0xf]
      %v190 = vld [vmem:[%s184 + $0x14] sm:$0xf]
      %v191 = vld [vmem:[%s184 + $0x18] sm:$0xf]
      %v192 = vld [vmem:[%s184 + $0x1c] sm:$0xf]
      %v193 = vld [vmem:[%s184 + $0x20] sm:$0xf]
      %v197 = vunpack.c.l.b16 %v172
      %v198 = vunpack.c.l.b16 %v173
      %v199 = vunpack.c.l.b16 %v183
      %v200 = vpack.c.b16 %v198, %v197
      %v201 = vpack.c.b16 %v199, %v199
      %vm202 = vsmask.f32 7424
      %v204 = vshrl.u32 %v200, 16
      %v206 = vshll.u32 %v200, 16
      %v208 = vrot.slane %v206, 1
      %v209 = vor.u32 %v204, %v208
      %v211 = vshll.u32 %v201, 16
      %v213 = vrot.slane %v211, 1
      %v214 = vsel %vm202, %v209, %v213
      %v224 = vunpack.c.l.b16 %v185
      %v225 = vunpack.c.l.b16 %v186
      %v226 = vunpack.c.l.b16 %v187
      %v227 = vunpack.c.l.b16 %v188
      %v228 = vunpack.c.l.b16 %v189
      %v229 = vunpack.c.l.b16 %v190
      %v230 = vunpack.c.l.b16 %v191
      %v231 = vunpack.c.l.b16 %v192
      %v232 = vunpack.c.l.b16 %v193
      %v233 = vpack.c.b16 %v225, %v224
      %v234 = vpack.c.b16 %v227, %v226
      %v235 = vpack.c.b16 %v229, %v228
      %v236 = vpack.c.b16 %v231, %v230
      %v237 = vpack.c.b16 %v232, %v232
      %vm242 = vcmask 588800
      %v244 = vsel %vm242, %v214, 0
      %vm246 = vcmask 1043456
      %v248 = vsel %vm246, %v237, 0
      %250 = vmatprep.subr.bf16.mxu0 0
      %251 = vmatpush1.bf16.msra.mxu0 %v233
      %252 = vmatprep.subr.bf16.mxu0 0
      %253 = vmatpush1.bf16.msra.mxu0 %v234
      %254 = vmatprep.subr.bf16.mxu0 0
      %255 = vmatpush1.bf16.msra.mxu0 %v235
      %256 = vmatprep.subr.bf16.mxu0 0
      %257 = vmatpush1.bf16.msra.mxu0 %v236
      %258 = vmatprep.subr.bf16.mxu0 0
      %259 = vmatpush1.bf16.msra.mxu0 %v248
      %260 = vmatprep.subr.bf16.mxu0 0
      %261 = vmatpush1.bf16.msra.mxu0 0
      %262 = vmatprep.subr.bf16.mxu0 0
      %263 = vmatpush1.bf16.msra.mxu0 0
      %264 = vmatprep.subr.bf16.mxu0 0
      %265 = vmatpush1.bf16.msra.mxu0 0
      %266 = vmatprep.subr.bf16.mxu0 0
      %267 = vmatpush1.bf16.msra.mxu0 0
      %268 = vmatprep.subr.bf16.mxu0 0
      %269 = vmatpush1.bf16.msra.mxu0 0
      %270 = vmatprep.subr.bf16.mxu0 0
      %271 = vmatpush1.bf16.msra.mxu0 0
      %272 = vmatprep.subr.bf16.mxu0 0
      %273 = vmatpush1.bf16.msra.mxu0 0
      %274 = vmatprep.subr.bf16.mxu0 0
      %275 = vmatpush1.bf16.msra.mxu0 0
      %276 = vmatprep.subr.bf16.mxu0 0
      %277 = vmatpush1.bf16.msra.mxu0 0
      %278 = vmatprep.subr.bf16.mxu0 0
      %279 = vmatpush1.bf16.msra.mxu0 0
      %280 = vmatprep.subr.bf16.mxu0 0
      %281 = vmatpush1.bf16.msra.mxu0 0
      %282 = vmatprep.mubr.bf16.mxu0 0
      %283 = vmatmul.mubr.bf16.gmra.mrb[0].mxu0 %v244
      %v284 = vpop.f32.mrb[0].mxu0
      %v285 = vadd.f32 0.0, %v284
      %v286 = vpop.f32.mrb[0].mxu0
      %v287 = vpop.f32.mrb[0].mxu0
      %v288 = vadd.f32 0.0, %v287
      %v289 = vpop.f32.mrb[0].mxu0
      %290 = vdwg.mxu0
      %v300 = vunpack.c.l.b16 %v174
      %v301 = vunpack.c.l.b16 %v175
      %v302 = vunpack.c.l.b16 %v176
      %v303 = vunpack.c.l.b16 %v177
      %v304 = vunpack.c.l.b16 %v178
      %v305 = vunpack.c.l.b16 %v179
      %v306 = vunpack.c.l.b16 %v180
      %v307 = vunpack.c.l.b16 %v181
      %v308 = vunpack.c.l.b16 %v182
      %v309 = vpack.c.b16 %v301, %v300
      %v310 = vpack.c.b16 %v303, %v302
      %v311 = vpack.c.b16 %v305, %v304
      %v312 = vpack.c.b16 %v307, %v306
      %v313 = vpack.c.b16 %v308, %v308
      %v318 = vsel %vm242, %v200, 0
      %v321 = vsel %vm246, %v313, 0
      %323 = vmatprep.subr.bf16.mxu0 0
      %324 = vmatpush1.bf16.msra.mxu0 %v309
      %325 = vmatprep.subr.bf16.mxu0 0
      %326 = vmatpush1.bf16.msra.mxu0 %v310
      %327 = vmatprep.subr.bf16.mxu0 0
      %328 = vmatpush1.bf16.msra.mxu0 %v311
      %329 = vmatprep.subr.bf16.mxu0 0
      %330 = vmatpush1.bf16.msra.mxu0 %v312
      %331 = vmatprep.subr.bf16.mxu0 0
      %332 = vmatpush1.bf16.msra.mxu0 %v321
      %333 = vmatprep.subr.bf16.mxu0 0
      %334 = vmatpush1.bf16.msra.mxu0 0
      %335 = vmatprep.subr.bf16.mxu0 0
      %336 = vmatpush1.bf16.msra.mxu0 0
      %337 = vmatprep.subr.bf16.mxu0 0
      %338 = vmatpush1.bf16.msra.mxu0 0
      %339 = vmatprep.subr.bf16.mxu0 0
      %340 = vmatpush1.bf16.msra.mxu0 0
      %341 = vmatprep.subr.bf16.mxu0 0
      %342 = vmatpush1.bf16.msra.mxu0 0
      %343 = vmatprep.subr.bf16.mxu0 0
      %344 = vmatpush1.bf16.msra.mxu0 0
      %345 = vmatprep.subr.bf16.mxu0 0
      %346 = vmatpush1.bf16.msra.mxu0 0
      %347 = vmatprep.subr.bf16.mxu0 0
      %348 = vmatpush1.bf16.msra.mxu0 0
      %349 = vmatprep.subr.bf16.mxu0 0
      %350 = vmatpush1.bf16.msra.mxu0 0
      %351 = vmatprep.subr.bf16.mxu0 0
      %352 = vmatpush1.bf16.msra.mxu0 0
      %353 = vmatprep.subr.bf16.mxu0 0
      %354 = vmatpush1.bf16.msra.mxu0 0
      %355 = vmatprep.mubr.bf16.mxu0 0
      %356 = vmatmul.mubr.bf16.gmra.mrb[0].mxu0 %v318
      %v357 = vpop.f32.mrb[0].mxu0
      %v358 = vadd.f32 %v285, %v357
      %v359 = vpop.f32.mrb[0].mxu0
      %v360 = vpop.f32.mrb[0].mxu0
      %v361 = vadd.f32 %v288, %v360
      %v362 = vpop.f32.mrb[0].mxu0
      %363 = vdwg.mxu0
      %v364 = vld [vmem:[%s165] sm:$0xe]
      %s365 = scalar_lea.vmem %s1, 72
      %v366 = vld [vmem:[%s365] sm:$0xf]
      %v367 = vld [vmem:[%s365 + $0x4] sm:$0xf]
      %v368 = vld [vmem:[%s365 + $0x8] sm:$0xf]
      %v369 = vld [vmem:[%s365 + $0xc] sm:$0xf]
      %v370 = vld [vmem:[%s365 + $0x10] sm:$0xf]
      %v371 = vld [vmem:[%s365 + $0x14] sm:$0xf]
      %v372 = vld [vmem:[%s365 + $0x18] sm:$0xf]
      %v373 = vld [vmem:[%s365 + $0x1c] sm:$0xf]
      %v374 = vld [vmem:[%s365 + $0x20] sm:$0xf]
      %v376 = vunpack.c.l.b16 %v364
      %v377 = vpack.c.b16 %v198, %v376
      %vm378 = vcmask 1046528
      %v379 = vrot.slane %v377, 1
      %v380 = vrot.slane %v201, 1
      %v381 = vsel %vm378, %v379, %v380
      %v391 = vunpack.c.l.b16 %v366
      %v392 = vunpack.c.l.b16 %v367
      %v393 = vunpack.c.l.b16 %v368
      %v394 = vunpack.c.l.b16 %v369
      %v395 = vunpack.c.l.b16 %v370
      %v396 = vunpack.c.l.b16 %v371
      %v397 = vunpack.c.l.b16 %v372
      %v398 = vunpack.c.l.b16 %v373
      %v399 = vunpack.c.l.b16 %v374
      %v400 = vpack.c.b16 %v392, %v391
      %v401 = vpack.c.b16 %v394, %v393
      %v402 = vpack.c.b16 %v396, %v395
      %v403 = vpack.c.b16 %v398, %v397
      %v404 = vpack.c.b16 %v399, %v399
      %v410 = vsel %vm242, %v381, 0
      %v413 = vsel %vm246, %v404, 0
      %415 = vmatprep.subr.bf16.mxu0 0
      %416 = vmatpush1.bf16.msra.mxu0 %v400
      %417 = vmatprep.subr.bf16.mxu0 0
      %418 = vmatpush1.bf16.msra.mxu0 %v401
      %419 = vmatprep.subr.bf16.mxu0 0
      %420 = vmatpush1.bf16.msra.mxu0 %v402
      %421 = vmatprep.subr.bf16.mxu0 0
      %422 = vmatpush1.bf16.msra.mxu0 %v403
      %423 = vmatprep.subr.bf16.mxu0 0
      %424 = vmatpush1.bf16.msra.mxu0 %v413
      %425 = vmatprep.subr.bf16.mxu0 0
      %426 = vmatpush1.bf16.msra.mxu0 0
      %427 = vmatprep.subr.bf16.mxu0 0
      %428 = vmatpush1.bf16.msra.mxu0 0
      %429 = vmatprep.subr.bf16.mxu0 0
      %430 = vmatpush1.bf16.msra.mxu0 0
      %431 = vmatprep.subr.bf16.mxu0 0
      %432 = vmatpush1.bf16.msra.mxu0 0
      %433 = vmatprep.subr.bf16.mxu0 0
      %434 = vmatpush1.bf16.msra.mxu0 0
      %435 = vmatprep.subr.bf16.mxu0 0
      %436 = vmatpush1.bf16.msra.mxu0 0
      %437 = vmatprep.subr.bf16.mxu0 0
      %438 = vmatpush1.bf16.msra.mxu0 0
      %439 = vmatprep.subr.bf16.mxu0 0
      %440 = vmatpush1.bf16.msra.mxu0 0
      %441 = vmatprep.subr.bf16.mxu0 0
      %442 = vmatpush1.bf16.msra.mxu0 0
      %443 = vmatprep.subr.bf16.mxu0 0
      %444 = vmatpush1.bf16.msra.mxu0 0
      %445 = vmatprep.subr.bf16.mxu0 0
      %446 = vmatpush1.bf16.msra.mxu0 0
      %447 = vmatprep.mubr.bf16.mxu0 0
      %448 = vmatmul.mubr.bf16.gmra.mrb[0].mxu0 %v410
      %v449 = vpop.f32.mrb[0].mxu0
      %v450 = vadd.f32 0.0, %v449
      %v451 = vpop.f32.mrb[0].mxu0
      %v452 = vpop.f32.mrb[0].mxu0
      %v453 = vadd.f32 0.0, %v452
      %v454 = vpop.f32.mrb[0].mxu0
      %455 = vdwg.mxu0
      %v456 = vadd.f32 %v358, %v450
      %v457 = vadd.f32 %v361, %v453
      %v458 = vld [vmem:[%s2] sm:$0x1]
      %v460 = vlaneseq
      %v461 = vshrl.u32 %v460, 7
      %v462 = vsub.s32 0, %v461
      %v463 = vrot.slane %v458, %v462
      %v465 = vadd.f32 %v456, %v463
      %v466 = vadd.f32 %v457, %v463
      %467 = vst [vmem:[%s170] sm:$0xff] %v465
      %468 = vst [vmem:[%s170 + $0x8] sm:$0xff] %v466
      %p469 = scmp.lt.s32.totalorder %s14, 1
      %s470 = scalar_select %p469, %s14, 1
      %s471 = smul.addr %s470, 2
      %s472 = smul.addr %s471, 8
      %s473 = scalar_lea.vmem %s3, %s472
      // Predicated region
      $region33: #{basis_conv2d_forward.1} parent=31 // pred_check
        %p474 = pneg %p100
      $region34: #{basis_conv2d_forward.1} parent=31 // pred_check_branch
        %476 = sbr.rel (%p474) target = $region36
      $region35: #{basis_conv2d_forward.1} parent=31 // pred_region
        _
      $region36: #{basis_conv2d_forward.1} parent=31 // pred_fallthru
        _
    $region32: #{basis_conv2d_forward.1} parent=5 // pred_fallthru
      _
    %p477 = scmp.le.s32.totalorder 2, %s9
    // Predicated region
    $region37: #{basis_conv2d_forward.1} parent=5 // pred_check
      %p478 = pneg %p477
    $region38: #{basis_conv2d_forward.1} parent=5 // pred_check_branch
      %480 = sbr.rel (%p478) target = $region40
    $region39: #{basis_conv2d_forward.1} parent=5 // pred_region
      %s481 = ssub.s32 %s9, 2
      // Predicated region
      $region41: #{basis_conv2d_forward.1} parent=39 // pred_check
        %p482 = pneg %p106
      $region42: #{basis_conv2d_forward.1} parent=39 // pred_check_branch
        %484 = sbr.rel (%p482) target = $region44
      $region43: #{basis_conv2d_forward.1} parent=39 // pred_region
        %p485 = scmp.lt.s32.totalorder %s15, 1
        %s486 = scalar_select %p485, %s15, 1
        %s487 = smul.addr %s486, 2
        %s488 = smul.addr %s487, 8
        %s489 = scalar_lea.vmem %s3, %s488
      $region44: #{basis_conv2d_forward.1} parent=39 // pred_fallthru
        _
    $region40: #{basis_conv2d_forward.1} parent=5 // pred_fallthru
      _
  $region6: #{basis_conv2d_forward.1} parent=0 // loop_footer
    %s13 = sadd.s32 1, %s9
  $region7: #{basis_conv2d_forward.1} parent=0 // loop_footer_branch
    %8 = sbr.rel target = $region3
  $region8: #{basis_conv2d_forward.1} parent=0 // loop_exit
    _

// kernel: tile.8
$region0: #{tile.8}
  #allocation0 [shape = 's32[1]{0}', space=sflag, size = 0x4, scoped, tag = 'scoped memory for tile.8']
  %s0 = inlined_call_operand.vmem [shape: f32[8], index: 0, kind: input, shape index: {}]
  %s1 = inlined_call_operand.vmem [shape: f32[16,8], index: 1, kind: output, shape index: {}]
  // Predicated region
  $region2: #{tile.8} parent=0 // pred_check
    _
  $region3: #{tile.8} parent=0 // pred_check_branch
    %3 = sbr.rel (0) target = $region5
  $region4: #{tile.8} parent=0 // pred_region
    _
  $region5: #{tile.8} parent=0 // pred_fallthru
    _
  %v4 = vld [vmem:[%s0] ss:$0 sm:$0xff]
  %5 = vst [vmem:[%s1] sm:$0xff] %v4
  %s6 = scalar_lea.vmem %s1, 8
  %7 = vst [vmem:[%s6] sm:$0xff] %v4

// kernel: tile.9
$region0: #{tile.9}
  %s0 = inlined_call_operand.vmem [shape: f32[16,8], index: 0, kind: input, shape index: {}]
  %s1 = inlined_call_operand.hbm [shape: f32[1,128], index: 1, kind: output, shape index: {}]
  $region1: #{tile.9} parent=0
    #allocation0 [shape = 'u8[512]{0}', space=vmem, size = 0x400, scoped, tag = 'operand span for operand 1']
    #allocation1 [shape = 's32[1]{0}', space=sflag, size = 0x4, scoped, tag = 'scoped memory for tile.9']
    #allocation2 [shape = 'u8[4096]{0}', space=vmem, size = 0x1000, scoped, tag = 'scoped mem for output reshape']
    %2 = vsyncpa [#allocation1], 0
    %v3 = vld [vmem:[%s0] sm:$0x1]
    %vm4 = vcmask 64512
    %5 = vst.msk [vmem:[#allocation2] sm:$0x1] %vm4, %v3
    %s6 = scalar_lea.vmem %s0, 15
    %v7 = vld [vmem:[%s6] sm:$0x1]
    %8 = vrot.lane.b32.xlu0 %v7, 120
    %v9 = vpop.permute.xlu0 %8
    %vm10 = vcmask 1048512
    %11 = vst.msk [vmem:[#allocation2] sm:$0x1] %vm10, %v9
    %s12 = scalar_lea.vmem %s0, 14
    %v13 = vld [vmem:[%s12] sm:$0x1]
    %14 = vrot.lane.b32.xlu0 %v13, 112
    %v15 = vpop.permute.xlu0 %14
    %vm16 = vcmask 982912
    %17 = vst.msk [vmem:[#allocation2] sm:$0x1] %vm16, %v15
    %s18 = scalar_lea.vmem %s0, 13
    %v19 = vld [vmem:[%s18] sm:$0x1]
    %20 = vrot.lane.b32.xlu0 %v19, 104
    %v21 = vpop.permute.xlu0 %20
    %vm22 = vcmask 917312
    %23 = vst.msk [vmem:[#allocation2] sm:$0x1] %vm22, %v21
    %s24 = scalar_lea.vmem %s0, 12
    %v25 = vld [vmem:[%s24] sm:$0x1]
    %26 = vrot.lane.b32.xlu0 %v25, 96
    %v27 = vpop.permute.xlu0 %26
    %vm28 = vcmask 851712
    %29 = vst.msk [vmem:[#allocation2] sm:$0x1] %vm28, %v27
    %s30 = scalar_lea.vmem %s0, 11
    %v31 = vld [vmem:[%s30] sm:$0x1]
    %32 = vrot.lane.b32.xlu0 %v31, 88
    %v33 = vpop.permute.xlu0 %32
    %vm34 = vcmask 786112
    %35 = vst.msk [vmem:[#allocation2] sm:$0x1] %vm34, %v33
    %s36 = scalar_lea.vmem %s0, 10
    %v37 = vld [vmem:[%s36] sm:$0x1]
    %38 = vrot.lane.b32.xlu0 %v37, 80
    %v39 = vpop.permute.xlu0 %38
    %vm40 = vcmask 720512
    %41 = vst.msk [vmem:[#allocation2] sm:$0x1] %vm40, %v39
    %s42 = scalar_lea.vmem %s0, 9
    %v43 = vld [vmem:[%s42] sm:$0x1]
    %44 = vrot.lane.b32.xlu0 %v43, 72
    %v45 = vpop.permute.xlu0 %44
    %vm46 = vcmask 654912
    %47 = vst.msk [vmem:[#allocation2] sm:$0x1] %vm46, %v45
    %s48 = scalar_lea.vmem %s0, 8
    %v49 = vld [vmem:[%s48] sm:$0x1]
    %50 = vrot.lane.b32.xlu0 %v49, 64
    %v51 = vpop.permute.xlu0 %50
    %vm52 = vcmask 589312
    %53 = vst.msk [vmem:[#allocation2] sm:$0x1] %vm52, %v51
    %s54 = scalar_lea.vmem %s0, 7
    %v55 = vld [vmem:[%s54] sm:$0x1]
    %56 = vrot.lane.b32.xlu0 %v55, 56
    %v57 = vpop.permute.xlu0 %56
    %vm58 = vcmask 523712
    %59 = vst.msk [vmem:[#allocation2] sm:$0x1] %vm58, %v57
    %s60 = scalar_lea.vmem %s0, 6
    %v61 = vld [vmem:[%s60] sm:$0x1]
    %62 = vrot.lane.b32.xlu0 %v61, 48
    %v63 = vpop.permute.xlu0 %62
    %vm64 = vcmask 458112
    %65 = vst.msk [vmem:[#allocation2] sm:$0x1] %vm64, %v63
    %s66 = scalar_lea.vmem %s0, 5
    %v67 = vld [vmem:[%s66] sm:$0x1]
    %68 = vrot.lane.b32.xlu0 %v67, 40
    %v69 = vpop.permute.xlu0 %68
    %vm70 = vcmask 392512
    %71 = vst.msk [vmem:[#allocation2] sm:$0x1] %vm70, %v69
    %s72 = scalar_lea.vmem %s0, 4
    %v73 = vld [vmem:[%s72] sm:$0x1]
    %74 = vrot.lane.b32.xlu0 %v73, 32
    %v75 = vpop.permute.xlu0 %74
    %vm76 = vcmask 326912
    %77 = vst.msk [vmem:[#allocation2] sm:$0x1] %vm76, %v75
    %s78 = scalar_lea.vmem %s0, 3
    %v79 = vld [vmem:[%s78] sm:$0x1]
    %80 = vrot.lane.b32.xlu0 %v79, 24
    %v81 = vpop.permute.xlu0 %80
    %vm82 = vcmask 261312
    %83 = vst.msk [vmem:[#allocation2] sm:$0x1] %vm82, %v81
    %s84 = scalar_lea.vmem %s0, 2
    %v85 = vld [vmem:[%s84] sm:$0x1]
    %86 = vrot.lane.b32.xlu0 %v85, 16
    %v87 = vpop.permute.xlu0 %86
    %vm88 = vcmask 195712
    %89 = vst.msk [vmem:[#allocation2] sm:$0x1] %vm88, %v87
    %s90 = scalar_lea.vmem %s0, 1
    %v91 = vld [vmem:[%s90] sm:$0x1]
    %92 = vrot.lane.b32.xlu0 %v91, 8
    %v93 = vpop.permute.xlu0 %92
    %vm94 = vcmask 130112
    %95 = vst.msk [vmem:[#allocation2] sm:$0x1] %vm94, %v93
    %s97 = sshllo.u32 0, 1
    %v99 = vld [vmem:[#allocation2] sm:%s97]
    %s100 = sshllo.u32 0, 1
    %101 = vst [vmem:[#allocation0] sm:%s100] %v99
    %s103 = ssub.s32 16, 16
    %104 = vsyncadd [#allocation1], %s103
    %s106 = sshll.u32 [#allocation0], 4
    %s107 = int_to_ptr.vmem [resolvable:$true] %s106
    %109 = dma.vmem_to_hbm [thread:$0]  %s107, 16, %s1, [#allocation1]
    %110 = dma.done [#allocation1], 16
    %111 = vsyncpa [#allocation1], 1

// kernel: basis_conv2d_forward.1
$region0: #{basis_conv2d_forward.1}
  #allocation0 [shape = 'u32[]', space=smem, size = 0x4, offset = 0x4, fixed_abs, tag = 'smem constant byte address 0x4 - core index']
  #allocation1 [shape = 'u32[144,128]{1,0:T(1,128)}', space=vmem, size = 0x12000, scoped, tag = 'internal scratch']
  %s0 = inlined_call_operand.vmem [shape: bf16[2,18,72], index: 0, kind: input, shape index: {}]
  %s1 = inlined_call_operand.vmem [shape: bf16[3,72,128], index: 1, kind: input, shape index: {}]
  %s2 = inlined_call_operand.vmem [shape: f32[1,128], index: 2, kind: input, shape index: {}]
  %s3 = inlined_call_operand.vmem [shape: f32[2,16,128], index: 3, kind: output, shape index: {}]
  %s4 = sld [smem:[#allocation0]]
  $region45: #{basis_conv2d_forward.1} parent=0
    _
  %s6 = ssub.s32 1, %s4
  %s7 = scalar_select 0, %s6, %s4
  loop: start=0, step=1, limit=4
  $region2: #{basis_conv2d_forward.1} parent=0 // loop_pre_header
    _
  $region3: #{basis_conv2d_forward.1} parent=0 // loop_header
    %s9 = sphi 0, %s13
    %p10 = scmp.ge.s32.totalorder %s9, 4
    %s19 = sphi 0, %s21
    %s22 = sphi 0, %s19
    %s23 = sphi 0, %s22
    %s39 = sphi 0, %s23
    %s43 = sphi 0, %s43
    %s45 = sphi 0, %s43
    %s46 = sphi 0, %s45
    %s60 = sphi 0, %s46
    %s64 = sphi 0, %s64
    %s66 = sphi 0, %s64
    %s67 = sphi 0, %s66
    %s81 = sphi 0, %s67
    %s87 = sphi 0, %s89
    %s90 = sphi 0, %s87
    %s91 = sphi 0, %s90
    %s107 = sphi 0, %s91
  $region4: #{basis_conv2d_forward.1} parent=0 // loop_header_branch
    %12 = sbr.rel (%p10) target = $region8
  $region5: #{basis_conv2d_forward.1} parent=0 // loop_body
    %s14 = ssub.s32 %s9, 1
    %s15 = ssub.s32 %s9, 2
    %s16 = sadd.s32 %s9, 1
    %s17 = ssub.s32 %s9, %s16
    %p18 = scmp.eq.s32.totalorder %s17, 0
    %s20 = sadd.s32 %s19, 1
    %s21 = scalar_select %p18, %s19, %s20
    %p24 = pneg %p18
    %p25 = scmp.eq.s32.totalorder %s9, 1
    %p26 = por %p24, %p25
    %p27 = scmp.ne.s32.totalorder %s19, %s22
    %p28 = scmp.eq.s32.totalorder %s9, 0
    %p29 = por %p27, %p28
    %p30 = scmp.ne.s32.totalorder %s19, %s22
    %p31 = scmp.eq.s32.totalorder %s14, 1
    %p32 = por %p30, %p31
    %p33 = scmp.ne.s32.totalorder %s22, %s23
    %p34 = scmp.eq.s32.totalorder %s14, 0
    %p35 = por %p33, %p34
    %p36 = scmp.ne.s32.totalorder %s22, %s23
    %p37 = scmp.eq.s32.totalorder %s15, 1
    %p38 = por %p36, %p37
    %p40 = scmp.ne.s32.totalorder %s23, %s39
    %p41 = scmp.eq.s32.totalorder %s15, 0
    %p42 = por %p40, %p41
    %s44 = sadd.s32 %s43, 1
    %p47 = scmp.eq.s32.totalorder %s9, 1
    %p48 = scmp.ne.s32.totalorder %s43, %s45
    %p49 = scmp.eq.s32.totalorder %s9, 0
    %p50 = por %p48, %p49
    %p51 = scmp.ne.s32.totalorder %s43, %s45
    %p52 = scmp.eq.s32.totalorder %s14, 1
    %p53 = por %p51, %p52
    %p54 = scmp.ne.s32.totalorder %s45, %s46
    %p55 = scmp.eq.s32.totalorder %s14, 0
    %p56 = por %p54, %p55
    %p57 = scmp.ne.s32.totalorder %s45, %s46
    %p58 = scmp.eq.s32.totalorder %s15, 1
    %p59 = por %p57, %p58
    %p61 = scmp.ne.s32.totalorder %s46, %s60
    %p62 = scmp.eq.s32.totalorder %s15, 0
    %p63 = por %p61, %p62
    %s65 = sadd.s32 %s64, 1
    %p68 = scmp.eq.s32.totalorder %s9, 1
    %p69 = scmp.ne.s32.totalorder %s64, %s66
    %p70 = scmp.eq.s32.totalorder %s9, 0
    %p71 = por %p69, %p70
    %p72 = scmp.ne.s32.totalorder %s64, %s66
    %p73 = scmp.eq.s32.totalorder %s14, 1
    %p74 = por %p72, %p73
    %p75 = scmp.ne.s32.totalorder %s66, %s67
    %p76 = scmp.eq.s32.totalorder %s14, 0
    %p77 = por %p75, %p76
    %p78 = scmp.ne.s32.totalorder %s66, %s67
    %p79 = scmp.eq.s32.totalorder %s15, 1
    %p80 = por %p78, %p79
    %p82 = scmp.ne.s32.totalorder %s67, %s81
    %p83 = scmp.eq.s32.totalorder %s15, 0
    %p84 = por %p82, %p83
    %s85 = ssub.s32 %s9, %s16
    %p86 = scmp.eq.s32.totalorder %s85, 0
    %s88 = sadd.s32 %s87, 1
    %s89 = scalar_select %p86, %s87, %s88
    %p92 = pneg %p86
    %p93 = scmp.eq.s32.totalorder %s9, 1
    %p94 = por %p92, %p93
    %p95 = scmp.ne.s32.totalorder %s87, %s90
    %p96 = scmp.eq.s32.totalorder %s9, 0
    %p97 = por %p95, %p96
    %p98 = scmp.ne.s32.totalorder %s87, %s90
    %p99 = scmp.eq.s32.totalorder %s14, 1
    %p100 = por %p98, %p99
    %p101 = scmp.ne.s32.totalorder %s90, %s91
    %p102 = scmp.eq.s32.totalorder %s14, 0
    %p103 = por %p101, %p102
    %p104 = scmp.ne.s32.totalorder %s90, %s91
    %p105 = scmp.eq.s32.totalorder %s15, 1
    %p106 = por %p104, %p105
    %p108 = scmp.ne.s32.totalorder %s91, %s107
    %p109 = scmp.eq.s32.totalorder %s15, 0
    %p110 = por %p108, %p109
    %p111 = scmp.le.s32.totalorder 1, %s9
    %p112 = scmp.lt.s32.totalorder %s9, 3
    %p113 = pnand %p111, %p112
    %p114 = pneg %p113
    // Predicated region
    $region9: #{basis_conv2d_forward.1} parent=5 // pred_check
      _
    $region10: #{basis_conv2d_forward.1} parent=5 // pred_check_branch
      %116 = sbr.rel (%p113) target = $region12
    $region11: #{basis_conv2d_forward.1} parent=5 // pred_region
      %s117 = ssub.s32 %s9, 1
      // Predicated region
      $region13: #{basis_conv2d_forward.1} parent=11 // pred_check
        %p118 = pneg %p56
      $region14: #{basis_conv2d_forward.1} parent=11 // pred_check_branch
        %120 = sbr.rel (%p118) target = $region16
      $region15: #{basis_conv2d_forward.1} parent=11 // pred_region
        _
      $region16: #{basis_conv2d_forward.1} parent=11 // pred_fallthru
        _
      // Predicated region
      $region17: #{basis_conv2d_forward.1} parent=11 // pred_check
        %p121 = pneg %p77
      $region18: #{basis_conv2d_forward.1} parent=11 // pred_check_branch
        %123 = sbr.rel (%p121) target = $region20
      $region19: #{basis_conv2d_forward.1} parent=11 // pred_region
        _
      $region20: #{basis_conv2d_forward.1} parent=11 // pred_fallthru
        _
    $region12: #{basis_conv2d_forward.1} parent=5 // pred_fallthru
      _
    %p124 = scmp.lt.s32.totalorder %s9, 2
    // Predicated region
    $region21: #{basis_conv2d_forward.1} parent=5 // pred_check
      %p125 = pneg %p124
    $region22: #{basis_conv2d_forward.1} parent=5 // pred_check_branch
      %127 = sbr.rel (%p125) target = $region24
    $region23: #{basis_conv2d_forward.1} parent=5 // pred_region
      // Predicated region
      $region25: #{basis_conv2d_forward.1} parent=23 // pred_check
        %p128 = pneg %p29
      $region26: #{basis_conv2d_forward.1} parent=23 // pred_check_branch
        %130 = sbr.rel (%p128) target = $region28
      $region27: #{basis_conv2d_forward.1} parent=23 // pred_region
        %p131 = scmp.lt.s32.totalorder %s9, 1
        %s132 = scalar_select %p131, %s9, 1
        %s133 = smul.addr %s132, 3
        %s134 = smul.addr %s133, 4
        %s135 = scalar_lea.vmem %s0, %s134
      $region28: #{basis_conv2d_forward.1} parent=23 // pred_fallthru
        _
    $region24: #{basis_conv2d_forward.1} parent=5 // pred_fallthru
      _
    %p136 = scmp.le.s32.totalorder 1, %s9
    %p137 = scmp.lt.s32.totalorder %s9, 3
    %p138 = pnand %p136, %p137
    %p139 = pneg %p138
    // Predicated region
    $region29: #{basis_conv2d_forward.1} parent=5 // pred_check
      _
    $region30: #{basis_conv2d_forward.1} parent=5 // pred_check_branch
      %141 = sbr.rel (%p138) target = $region32
    $region31: #{basis_conv2d_forward.1} parent=5 // pred_region
      %s142 = ssub.s32 %s9, 1
      %p143 = scmp.lt.s32.totalorder %s14, 1
      %s144 = scalar_select %p143, %s14, 1
      %s145 = smul.addr %s144, 3
      %s146 = smul.addr %s145, 4
      %s147 = scalar_lea.vmem %s0, %s146
      %p148 = pneg %p35
      %p149 = pneg %p32
      %p150 = pneg %p56
      %p151 = pneg %p53
      %p152 = pneg %p77
      %p153 = pneg %p74
      %p154 = pneg %p103
      %p155 = pneg %p100
      %p156 = scmp.lt.s32.totalorder %s14, 1
      %s157 = scalar_select %p156, %s14, 1
      %s158 = smul.addr %s157, 2
      %s159 = smul.addr %s158, 8
      %s160 = scalar_lea.vmem %s3, %s159
      %p161 = scmp.lt.s32.totalorder %s14, 1
      %s162 = scalar_select %p161, %s14, 1
      %s163 = smul.addr %s162, 3
      %s164 = smul.addr %s163, 4
      %s165 = scalar_lea.vmem %s0, %s164
      %p166 = scmp.lt.s32.totalorder %s14, 1
      %s167 = scalar_select %p166, %s14, 1
      %s168 = smul.addr %s167, 2
      %s169 = smul.addr %s168, 8
      %s170 = scalar_lea.vmem %s3, %s169
      %v172 = vld [vmem:[%s165] sm:$0xf]
      %v173 = vld [vmem:[%s165 + $0x4] sm:$0xf]
      %v174 = vld [vmem:[%s1] sm:$0xf]
      %v175 = vld [vmem:[%s1 + $0x4] sm:$0xf]
      %v176 = vld [vmem:[%s1 + $0x8] sm:$0xf]
      %v177 = vld [vmem:[%s1 + $0xc] sm:$0xf]
      %v178 = vld [vmem:[%s1 + $0x10] sm:$0xf]
      %v179 = vld [vmem:[%s1 + $0x14] sm:$0xf]
      %v180 = vld [vmem:[%s1 + $0x18] sm:$0xf]
      %v181 = vld [vmem:[%s1 + $0x1c] sm:$0xf]
      %v182 = vld [vmem:[%s1 + $0x20] sm:$0xf]
      %v183 = vld [vmem:[%s165 + $0x8] sm:$0x1]
      %s184 = scalar_lea.vmem %s1, 36
      %v185 = vld [vmem:[%s184] sm:$0xf]
      %v186 = vld [vmem:[%s184 + $0x4] sm:$0xf]
      %v187 = vld [vmem:[%s184 + $0x8] sm:$0xf]
      %v188 = vld [vmem:[%s184 + $0xc] sm:$0xf]
      %v189 = vld [vmem:[%s184 + $0x10] sm:$0xf]
      %v190 = vld [vmem:[%s184 + $0x14] sm:$0xf]
      %v191 = vld [vmem:[%s184 + $0x18] sm:$0xf]
      %v192 = vld [vmem:[%s184 + $0x1c] sm:$0xf]
      %v193 = vld [vmem:[%s184 + $0x20] sm:$0xf]
      %v197 = vunpack.c.l.b16 %v172
      %v198 = vunpack.c.l.b16 %v173
      %v199 = vunpack.c.l.b16 %v183
      %v200 = vpack.c.b16 %v198, %v197
      %v201 = vpack.c.b16 %v199, %v199
      %vm202 = vsmask.f32 7424
      %v204 = vshrl.u32 %v200, 16
      %v206 = vshll.u32 %v200, 16
      %v208 = vrot.slane %v206, 1
      %v209 = vor.u32 %v204, %v208
      %v211 = vshll.u32 %v201, 16
      %v213 = vrot.slane %v211, 1
      %v214 = vsel %vm202, %v209, %v213
      %v224 = vunpack.c.l.b16 %v185
      %v225 = vunpack.c.l.b16 %v186
      %v226 = vunpack.c.l.b16 %v187
      %v227 = vunpack.c.l.b16 %v188
      %v228 = vunpack.c.l.b16 %v189
      %v229 = vunpack.c.l.b16 %v190
      %v230 = vunpack.c.l.b16 %v191
      %v231 = vunpack.c.l.b16 %v192
      %v232 = vunpack.c.l.b16 %v193
      %v233 = vpack.c.b16 %v225, %v224
      %v234 = vpack.c.b16 %v227, %v226
      %v235 = vpack.c.b16 %v229, %v228
      %v236 = vpack.c.b16 %v231, %v230
      %v237 = vpack.c.b16 %v232, %v232
      %vm242 = vcmask 588800
      %v244 = vsel %vm242, %v214, 0
      %vm246 = vcmask 1043456
      %v248 = vsel %vm246, %v237, 0
      %250 = vmatprep.subr.bf16.mxu0 0
      %251 = vmatpush1.bf16.msra.mxu0 %v233
      %252 = vmatprep.subr.bf16.mxu0 0
      %253 = vmatpush1.bf16.msra.mxu0 %v234
      %254 = vmatprep.subr.bf16.mxu0 0
      %255 = vmatpush1.bf16.msra.mxu0 %v235
      %256 = vmatprep.subr.bf16.mxu0 0
      %257 = vmatpush1.bf16.msra.mxu0 %v236
      %258 = vmatprep.subr.bf16.mxu0 0
      %259 = vmatpush1.bf16.msra.mxu0 %v248
      %260 = vmatprep.subr.bf16.mxu0 0
      %261 = vmatpush1.bf16.msra.mxu0 0
      %262 = vmatprep.subr.bf16.mxu0 0
      %263 = vmatpush1.bf16.msra.mxu0 0
      %264 = vmatprep.subr.bf16.mxu0 0
      %265 = vmatpush1.bf16.msra.mxu0 0
      %266 = vmatprep.subr.bf16.mxu0 0
      %267 = vmatpush1.bf16.msra.mxu0 0
      %268 = vmatprep.subr.bf16.mxu0 0
      %269 = vmatpush1.bf16.msra.mxu0 0
      %270 = vmatprep.subr.bf16.mxu0 0
      %271 = vmatpush1.bf16.msra.mxu0 0
      %272 = vmatprep.subr.bf16.mxu0 0
      %273 = vmatpush1.bf16.msra.mxu0 0
      %274 = vmatprep.subr.bf16.mxu0 0
      %275 = vmatpush1.bf16.msra.mxu0 0
      %276 = vmatprep.subr.bf16.mxu0 0
      %277 = vmatpush1.bf16.msra.mxu0 0
      %278 = vmatprep.subr.bf16.mxu0 0
      %279 = vmatpush1.bf16.msra.mxu0 0
      %280 = vmatprep.subr.bf16.mxu0 0
      %281 = vmatpush1.bf16.msra.mxu0 0
      %282 = vmatprep.mubr.bf16.mxu0 0
      %283 = vmatmul.mubr.bf16.gmra.mrb[0].mxu0 %v244
      %v284 = vpop.f32.mrb[0].mxu0
      %v285 = vadd.f32 0.0, %v284
      %v286 = vpop.f32.mrb[0].mxu0
      %v287 = vpop.f32.mrb[0].mxu0
      %v288 = vadd.f32 0.0, %v287
      %v289 = vpop.f32.mrb[0].mxu0
      %290 = vdwg.mxu0
      %v300 = vunpack.c.l.b16 %v174
      %v301 = vunpack.c.l.b16 %v175
      %v302 = vunpack.c.l.b16 %v176
      %v303 = vunpack.c.l.b16 %v177
      %v304 = vunpack.c.l.b16 %v178
      %v305 = vunpack.c.l.b16 %v179
      %v306 = vunpack.c.l.b16 %v180
      %v307 = vunpack.c.l.b16 %v181
      %v308 = vunpack.c.l.b16 %v182
      %v309 = vpack.c.b16 %v301, %v300
      %v310 = vpack.c.b16 %v303, %v302
      %v311 = vpack.c.b16 %v305, %v304
      %v312 = vpack.c.b16 %v307, %v306
      %v313 = vpack.c.b16 %v308, %v308
      %v318 = vsel %vm242, %v200, 0
      %v321 = vsel %vm246, %v313, 0
      %323 = vmatprep.subr.bf16.mxu0 0
      %324 = vmatpush1.bf16.msra.mxu0 %v309
      %325 = vmatprep.subr.bf16.mxu0 0
      %326 = vmatpush1.bf16.msra.mxu0 %v310
      %327 = vmatprep.subr.bf16.mxu0 0
      %328 = vmatpush1.bf16.msra.mxu0 %v311
      %329 = vmatprep.subr.bf16.mxu0 0
      %330 = vmatpush1.bf16.msra.mxu0 %v312
      %331 = vmatprep.subr.bf16.mxu0 0
      %332 = vmatpush1.bf16.msra.mxu0 %v321
      %333 = vmatprep.subr.bf16.mxu0 0
      %334 = vmatpush1.bf16.msra.mxu0 0
      %335 = vmatprep.subr.bf16.mxu0 0
      %336 = vmatpush1.bf16.msra.mxu0 0
      %337 = vmatprep.subr.bf16.mxu0 0
      %338 = vmatpush1.bf16.msra.mxu0 0
      %339 = vmatprep.subr.bf16.mxu0 0
      %340 = vmatpush1.bf16.msra.mxu0 0
      %341 = vmatprep.subr.bf16.mxu0 0
      %342 = vmatpush1.bf16.msra.mxu0 0
      %343 = vmatprep.subr.bf16.mxu0 0
      %344 = vmatpush1.bf16.msra.mxu0 0
      %345 = vmatprep.subr.bf16.mxu0 0
      %346 = vmatpush1.bf16.msra.mxu0 0
      %347 = vmatprep.subr.bf16.mxu0 0
      %348 = vmatpush1.bf16.msra.mxu0 0
      %349 = vmatprep.subr.bf16.mxu0 0
      %350 = vmatpush1.bf16.msra.mxu0 0
      %351 = vmatprep.subr.bf16.mxu0 0
      %352 = vmatpush1.bf16.msra.mxu0 0
      %353 = vmatprep.subr.bf16.mxu0 0
      %354 = vmatpush1.bf16.msra.mxu0 0
      %355 = vmatprep.mubr.bf16.mxu0 0
      %356 = vmatmul.mubr.bf16.gmra.mrb[0].mxu0 %v318
      %v357 = vpop.f32.mrb[0].mxu0
      %v358 = vadd.f32 %v285, %v357
      %v359 = vpop.f32.mrb[0].mxu0
      %v360 = vpop.f32.mrb[0].mxu0
      %v361 = vadd.f32 %v288, %v360
      %v362 = vpop.f32.mrb[0].mxu0
      %363 = vdwg.mxu0
      %v364 = vld [vmem:[%s165] sm:$0xe]
      %s365 = scalar_lea.vmem %s1, 72
      %v366 = vld [vmem:[%s365] sm:$0xf]
      %v367 = vld [vmem:[%s365 + $0x4] sm:$0xf]
      %v368 = vld [vmem:[%s365 + $0x8] sm:$0xf]
      %v369 = vld [vmem:[%s365 + $0xc] sm:$0xf]
      %v370 = vld [vmem:[%s365 + $0x10] sm:$0xf]
      %v371 = vld [vmem:[%s365 + $0x14] sm:$0xf]
      %v372 = vld [vmem:[%s365 + $0x18] sm:$0xf]
      %v373 = vld [vmem:[%s365 + $0x1c] sm:$0xf]
      %v374 = vld [vmem:[%s365 + $0x20] sm:$0xf]
      %v376 = vunpack.c.l.b16 %v364
      %v377 = vpack.c.b16 %v198, %v376
      %vm378 = vcmask 1046528
      %v379 = vrot.slane %v377, 1
      %v380 = vrot.slane %v201, 1
      %v381 = vsel %vm378, %v379, %v380
      %v391 = vunpack.c.l.b16 %v366
      %v392 = vunpack.c.l.b16 %v367
      %v393 = vunpack.c.l.b16 %v368
      %v394 = vunpack.c.l.b16 %v369
      %v395 = vunpack.c.l.b16 %v370
      %v396 = vunpack.c.l.b16 %v371
      %v397 = vunpack.c.l.b16 %v372
      %v398 = vunpack.c.l.b16 %v373
      %v399 = vunpack.c.l.b16 %v374
      %v400 = vpack.c.b16 %v392, %v391
      %v401 = vpack.c.b16 %v394, %v393
      %v402 = vpack.c.b16 %v396, %v395
      %v403 = vpack.c.b16 %v398, %v397
      %v404 = vpack.c.b16 %v399, %v399
      %v410 = vsel %vm242, %v381, 0
      %v413 = vsel %vm246, %v404, 0
      %415 = vmatprep.subr.bf16.mxu0 0
      %416 = vmatpush1.bf16.msra.mxu0 %v400
      %417 = vmatprep.subr.bf16.mxu0 0
      %418 = vmatpush1.bf16.msra.mxu0 %v401
      %419 = vmatprep.subr.bf16.mxu0 0
      %420 = vmatpush1.bf16.msra.mxu0 %v402
      %421 = vmatprep.subr.bf16.mxu0 0
      %422 = vmatpush1.bf16.msra.mxu0 %v403
      %423 = vmatprep.subr.bf16.mxu0 0
      %424 = vmatpush1.bf16.msra.mxu0 %v413
      %425 = vmatprep.subr.bf16.mxu0 0
      %426 = vmatpush1.bf16.msra.mxu0 0
      %427 = vmatprep.subr.bf16.mxu0 0
      %428 = vmatpush1.bf16.msra.mxu0 0
      %429 = vmatprep.subr.bf16.mxu0 0
      %430 = vmatpush1.bf16.msra.mxu0 0
      %431 = vmatprep.subr.bf16.mxu0 0
      %432 = vmatpush1.bf16.msra.mxu0 0
      %433 = vmatprep.subr.bf16.mxu0 0
      %434 = vmatpush1.bf16.msra.mxu0 0
      %435 = vmatprep.subr.bf16.mxu0 0
      %436 = vmatpush1.bf16.msra.mxu0 0
      %437 = vmatprep.subr.bf16.mxu0 0
      %438 = vmatpush1.bf16.msra.mxu0 0
      %439 = vmatprep.subr.bf16.mxu0 0
      %440 = vmatpush1.bf16.msra.mxu0 0
      %441 = vmatprep.subr.bf16.mxu0 0
      %442 = vmatpush1.bf16.msra.mxu0 0
      %443 = vmatprep.subr.bf16.mxu0 0
      %444 = vmatpush1.bf16.msra.mxu0 0
      %445 = vmatprep.subr.bf16.mxu0 0
      %446 = vmatpush1.bf16.msra.mxu0 0
      %447 = vmatprep.mubr.bf16.mxu0 0
      %448 = vmatmul.mubr.bf16.gmra.mrb[0].mxu0 %v410
      %v449 = vpop.f32.mrb[0].mxu0
      %v450 = vadd.f32 0.0, %v449
      %v451 = vpop.f32.mrb[0].mxu0
      %v452 = vpop.f32.mrb[0].mxu0
      %v453 = vadd.f32 0.0, %v452
      %v454 = vpop.f32.mrb[0].mxu0
      %455 = vdwg.mxu0
      %v456 = vadd.f32 %v358, %v450
      %v457 = vadd.f32 %v361, %v453
      %v458 = vld [vmem:[%s2] sm:$0x1]
      %v460 = vlaneseq
      %v461 = vshrl.u32 %v460, 7
      %v462 = vsub.s32 0, %v461
      %v463 = vrot.slane %v458, %v462
      %v465 = vadd.f32 %v456, %v463
      %v466 = vadd.f32 %v457, %v463
      %467 = vst [vmem:[%s170] sm:$0xff] %v465
      %468 = vst [vmem:[%s170 + $0x8] sm:$0xff] %v466
      %p469 = scmp.lt.s32.totalorder %s14, 1
      %s470 = scalar_select %p469, %s14, 1
      %s471 = smul.addr %s470, 2
      %s472 = smul.addr %s471, 8
      %s473 = scalar_lea.vmem %s3, %s472
      // Predicated region
      $region33: #{basis_conv2d_forward.1} parent=31 // pred_check
        %p474 = pneg %p100
      $region34: #{basis_conv2d_forward.1} parent=31 // pred_check_branch
        %476 = sbr.rel (%p474) target = $region36
      $region35: #{basis_conv2d_forward.1} parent=31 // pred_region
        _
      $region36: #{basis_conv2d_forward.1} parent=31 // pred_fallthru
        _
    $region32: #{basis_conv2d_forward.1} parent=5 // pred_fallthru
      _
    %p477 = scmp.le.s32.totalorder 2, %s9
    // Predicated region
    $region37: #{basis_conv2d_forward.1} parent=5 // pred_check
      %p478 = pneg %p477
    $region38: #{basis_conv2d_forward.1} parent=5 // pred_check_branch
      %480 = sbr.rel (%p478) target = $region40
    $region39: #{basis_conv2d_forward.1} parent=5 // pred_region
      %s481 = ssub.s32 %s9, 2
      // Predicated region
      $region41: #{basis_conv2d_forward.1} parent=39 // pred_check
        %p482 = pneg %p106
      $region42: #{basis_conv2d_forward.1} parent=39 // pred_check_branch
        %484 = sbr.rel (%p482) target = $region44
      $region43: #{basis_conv2d_forward.1} parent=39 // pred_region
        %p485 = scmp.lt.s32.totalorder %s15, 1
        %s486 = scalar_select %p485, %s15, 1
        %s487 = smul.addr %s486, 2
        %s488 = smul.addr %s487, 8
        %s489 = scalar_lea.vmem %s3, %s488
      $region44: #{basis_conv2d_forward.1} parent=39 // pred_fallthru
        _
    $region40: #{basis_conv2d_forward.1} parent=5 // pred_fallthru
      _
  $region6: #{basis_conv2d_forward.1} parent=0 // loop_footer
    %s13 = sadd.s32 1, %s9
  $region7: #{basis_conv2d_forward.1} parent=0 // loop_footer_branch
    %8 = sbr.rel target = $region3
  $region8: #{basis_conv2d_forward.1} parent=0 // loop_exit
    _

</llo_original>
